<compile_context>
chip_gen: v6e
topology: v6e:2x2x1
jax: 0.10.0
libtpu: 0.0.40
codegen_flags: <defaults>
</compile_context>

<pallas_src>
import jax
import jax.numpy as jnp
from jax import lax
from jax.experimental import pallas as pl
from jax.experimental.pallas import tpu as pltpu


def _dwconv_kernel(xm_ref, xu_ref, xd_ref, k_ref, b_ref, o_ref):
    """Depthwise 3x3 conv on one (tb, th, W, tc) tile with 1-row halos.

    xm_ref: (tb, th, W, tc) main rows of the tile
    xu_ref: (tb, 1, W, tc)  row just above the tile (clamped; zeroed at h == 0)
    xd_ref: (tb, 1, W, tc)  row just below the tile (clamped; zeroed at last h)
    k_ref : (3, 3, tc)      depthwise weights (kh, kw, C)
    b_ref : (1, tc)         bias
    """
    tb, th, W, tc = xm_ref.shape
    h = pl.program_id(2)
    nh = pl.num_programs(2)
    f32 = jnp.float32

    x = xm_ref[...].astype(f32)
    up_valid = (h > 0).astype(f32)
    dn_valid = (h < nh - 1).astype(f32)
    xu = xu_ref[...].astype(f32) * up_valid
    xd = xd_ref[...].astype(f32) * dn_valid

    # Extended slab: rows [r0-1, r0, ..., r0+th-1, r0+th] with border halos
    # already zeroed.  One copy instead of per-row zero-padded concats.
    x_ext = jnp.concatenate([xu, x, xd], axis=1)          # (tb, th+2, W, tc)
    # W-direction +-1 taps: XLU sublane rotations (wrap-around fixed by masks).
    x_ext_l = pltpu.roll(x_ext, shift=1, axis=2)           # x[..., w-1, :]
    x_ext_r = pltpu.roll(x_ext, shift=W - 1, axis=2)       # x[..., w+1, :]

    k = k_ref[...].astype(f32)                             # (3, 3, tc)
    # Tiny (1, 1, W, tc) boundary masks folded into the tap weights -> no
    # full-tile iota/compare/select; each tap is just one mul + one add.
    col = lax.broadcasted_iota(jnp.int32, (1, 1, W, tc), 2)
    m_l = (col >= 1).astype(f32)
    m_r = (col <= W - 2).astype(f32)

    acc = jnp.zeros((tb, th, W, tc), f32) + b_ref[0].astype(f32)
    for i in range(3):                                     # static unroll: 3 kernel rows
        acc = acc + x_ext[:, i:i + th] * k[i, 1]
        acc = acc + x_ext_l[:, i:i + th] * (m_l * k[i, 0])
        acc = acc + x_ext_r[:, i:i + th] * (m_r * k[i, 2])
    o_ref[...] = acc.astype(o_ref.dtype)


def _pick_blocks(B, H, W, C, slab_budget_bytes):
    """Pick (tb, th, tc): lane-dense channel tiles + row tiling to bound VMEM."""
    bpe = 4  # f32 compute slabs
    # Channel tile: largest multiple-of-128 divisor of C that still leaves room
    # for a few rows per slab (bigger tc => longer contiguous DMA runs).
    cands = [d for d in range(128, C + 1, 128) if C % d == 0] or [C]
    tc = cands[0]
    th_target = min(H, 8)
    for d in sorted(cands, reverse=True):
        if th_target * W * d * bpe <= slab_budget_bytes:
            tc = d
            break
    # Row tile: largest divisor of H whose (tb = 1) slab fits the budget.
    th = 1
    for d in sorted((d for d in range(1, H + 1) if H % d == 0), reverse=True):
        if d * W * tc * bpe <= slab_budget_bytes:
            th = d
            break
    # TODO(synk): if even a single (1, 1, W, tc) row slab exceeds the budget
    # (very large W), a W-tiled variant with column halos is needed as well.
    # Batch tile: largest divisor of B that fits.
    tb = 1
    for d in sorted((d for d in range(1, B + 1) if B % d == 0), reverse=True):
        if d * th * W * tc * bpe <= slab_budget_bytes:
            tb = d
            break
    # Megacore: prefer >= 2 grid steps so both TensorCores get work (v7x).
    if (C // tc) * (B // tb) * (H // th) == 1:
        if B > 1:
            tb = max(1, tb // 2)
        elif H > 1:
            th = [d for d in range(1, H) if H % d == 0][-1]
    return tb, th, tc


def dwconv_forward(x, weight, bias, *, blocks=None):
    """x: (B, H, W, C); weight: (3, 3, C); bias: (1, C) -> (B, H, W, C)."""
    B, H, W, C = x.shape
    orig_c = C
    pad_c = (-C) % 128
    if pad_c:
        # Lane-dense last dim (multiple of 128) -> unmasked vector stores.
        x = jnp.pad(x, ((0, 0), (0, 0), (0, 0), (0, pad_c)))
        weight = jnp.pad(weight, ((0, 0), (0, 0), (0, pad_c)))
        bias = jnp.pad(bias, ((0, 0), (0, pad_c)))
        C += pad_c

    # Generation-aware VMEM budget (v5e/v6e: 128 MiB, v7x: 64 MiB per core).
    cap = 128 * 1024 * 1024
    try:
        cap = int(getattr(pltpu.get_tpu_info(), "vmem_capacity_bytes", cap))
    except Exception:
        pass
    vmem_limit = int(0.75 * cap)
    # ~2x double-buffered input + 2x output blocks + ~5 in-kernel f32 slabs.
    slab_budget = vmem_limit // 10

    if blocks is None:
        tb, th, tc = _pick_blocks(B, H, W, C, slab_budget)
    else:
        tb, th, tc = blocks

    # Channels outermost: the (3,3,tc)/(1,tc) weight & bias blocks keep the
    # same block index across all inner steps (no re-DMA).
    grid = (C // tc, B // tb, H // th)

    def xm_map(c, b, h):
        return (b, h, 0, c)

    def xu_map(c, b, h):  # row just above the tile, clamped at the top border
        return (b, jnp.maximum(h * th - 1, 0), 0, c)

    def xd_map(c, b, h):  # row just below the tile, clamped at the bottom border
        return (b, jnp.minimum(h * th + th, H - 1), 0, c)

    cost = pl.CostEstimate(
        flops=2 * 9 * B * H * W * C,
        transcendentals=0,
        bytes_accessed=int(x.dtype.itemsize) * 2 * B * H * W * C + 4 * (9 * C + C),
    )

    out = pl.pallas_call(
        _dwconv_kernel,
        out_shape=jax.ShapeDtypeStruct((B, H, W, C), x.dtype),
        grid_spec=pltpu.PrefetchScalarGridSpec(
            num_scalar_prefetch=0,
            grid=grid,
            in_specs=[
                pl.BlockSpec((tb, th, W, tc), xm_map),
                pl.BlockSpec((tb, 1, W, tc), xu_map),
                pl.BlockSpec((tb, 1, W, tc), xd_map),
                pl.BlockSpec((3, 3, tc), lambda c, b, h: (0, 0, c)),
                pl.BlockSpec((1, tc), lambda c, b, h: (0, c)),
            ],
            out_specs=pl.BlockSpec((tb, th, W, tc), xm_map),
        ),
        compiler_params=pltpu.CompilerParams(
            dimension_semantics=("parallel", "parallel", "parallel"),
            vmem_limit_bytes=vmem_limit),
        cost_estimate=cost,
    )(x, x, x, weight, bias)

    if pad_c:
        out = out[..., :orig_c]
    return out


def init_params(key, dim):
    """Synthetic params mirroring nn.Conv2d(dim, dim, 3, padding=1, groups=dim).

    PyTorch weight (dim, 1, 3, 3) is stored channel-last as (3, 3, dim)."""
    k1, k2 = jax.random.split(key)
    bound = 1.0 / jnp.sqrt(jnp.float32(9.0))  # fan_in = (dim/groups) * 3 * 3 = 9
    weight = jax.random.uniform(k1, (3, 3, dim), jnp.float32, -bound, bound)
    bias = jax.random.uniform(k2, (1, dim), jnp.float32, -bound, bound)
    return weight, bias


def ref_forward(x, weight, bias):
    """Pure-JAX reference matching the PyTorch forward (NHWC in/out)."""
    C = x.shape[-1]
    conv = lax.conv_general_dilated(
        x, weight[:, :, None, :],                      # (3, 3, 1, C) HWIO
        window_strides=(1, 1), padding=((1, 1), (1, 1)),
        dimension_numbers=('NHWC', 'HWIO', 'NHWC'),
        feature_group_count=C)
    return conv + bias[0]


if __name__ == "__main__":
    key = jax.random.PRNGKey(0)
    kx, kp = jax.random.split(key)

    B, H, W, dim = 2, 8, 8, 384   # channels: multiple of 128 (lane-dense)
    x = jax.random.normal(kx, (B, H, W, dim), jnp.float32)
    weight, bias = init_params(kp, dim)

    expected = ref_forward(x, weight, bias)

    # Auto-tiled configuration.
    out = jax.block_until_ready(dwconv_forward(x, weight, bias))
    assert out.shape == expected.shape, (out.shape, expected.shape)
    if not jnp.allclose(out, expected, atol=1e-4, rtol=1e-4):
        raise AssertionError("Pallas kernel (auto tiles) does not match reference")

    # Forced row + channel tiling to exercise the halo path (tb=1, th=2, tc=128).
    out_tiled = jax.block_until_ready(
        dwconv_forward(x, weight, bias, blocks=(1, 2, 128)))
    if not jnp.allclose(out_tiled, expected, atol=1e-4, rtol=1e-4):
        raise AssertionError("Pallas kernel (row-tiled) does not match reference")

    print("KERNEL_OK")
</pallas_src>

<mosaic_0001>
module attributes {stable_mosaic.version = 11 : i64} {
  func.func @_dwconv_kernel(%arg0: i32, %arg1: i32, %arg2: i32, %arg3: memref<1x8x8x384xf32, #tpu.memory_space<vmem>>, %arg4: memref<1x1x8x384xf32, #tpu.memory_space<vmem>>, %arg5: memref<1x1x8x384xf32, #tpu.memory_space<vmem>>, %arg6: memref<3x3x384xf32, #tpu.memory_space<vmem>>, %arg7: memref<1x384xf32, #tpu.memory_space<vmem>>, %arg8: memref<1x8x8x384xf32, #tpu.memory_space<vmem>>) attributes {dimension_semantics = [#tpu.dimension_semantics<parallel>, #tpu.dimension_semantics<parallel>, #tpu.dimension_semantics<parallel>], iteration_bounds = array<i64: 1, 2, 1>, scalar_prefetch = 0 : i64, scratch_operands = 0 : i64, tpu.core_type = #tpu.core_type<tc>, window_params = [{transform_indices = @transform_0, window_bounds = array<i64: 1, 8, 8, 384>}, {transform_indices = @transform_1, window_bounds = array<i64: 1, 1, 8, 384>}, {transform_indices = @transform_2, window_bounds = array<i64: 1, 1, 8, 384>}, {transform_indices = @transform_3, window_bounds = array<i64: 3, 3, 384>}, {transform_indices = @transform_4, window_bounds = array<i64: 1, 384>}, {transform_indices = @transform_5, window_bounds = array<i64: 1, 8, 8, 384>}]} {
    %c0 = arith.constant 0 : index
    %c0_0 = arith.constant 0 : index
    %c0_1 = arith.constant 0 : index
    %c0_2 = arith.constant 0 : index
    %0 = vector.load %arg3[%c0, %c0_0, %c0_1, %c0_2] : memref<1x8x8x384xf32, #tpu.memory_space<vmem>>, vector<1x8x8x384xf32>
    %c0_i32 = arith.constant 0 : i32
    %1 = arith.cmpi sgt, %arg2, %c0_i32 : i32
    %2 = arith.extui %1 : i1 to i32
    %3 = arith.sitofp %2 : i32 to f32
    %c0_i32_3 = arith.constant 0 : i32
    %4 = arith.cmpi slt, %arg2, %c0_i32_3 : i32
    %5 = arith.extui %4 : i1 to i32
    %6 = arith.sitofp %5 : i32 to f32
    %c0_4 = arith.constant 0 : index
    %c0_5 = arith.constant 0 : index
    %c0_6 = arith.constant 0 : index
    %c0_7 = arith.constant 0 : index
    %7 = vector.load %arg4[%c0_4, %c0_5, %c0_6, %c0_7] : memref<1x1x8x384xf32, #tpu.memory_space<vmem>>, vector<1x1x8x384xf32>
    %8 = vector.broadcast %3 : f32 to vector<1x1x8x384xf32>
    %9 = arith.mulf %7, %8 : vector<1x1x8x384xf32>
    %c0_8 = arith.constant 0 : index
    %c0_9 = arith.constant 0 : index
    %c0_10 = arith.constant 0 : index
    %c0_11 = arith.constant 0 : index
    %10 = vector.load %arg5[%c0_8, %c0_9, %c0_10, %c0_11] : memref<1x1x8x384xf32, #tpu.memory_space<vmem>>, vector<1x1x8x384xf32>
    %11 = vector.broadcast %6 : f32 to vector<1x1x8x384xf32>
    %12 = arith.mulf %10, %11 : vector<1x1x8x384xf32>
    %13 = tpu.concatenate %9, %0, %12 in 1 : vector<1x1x8x384xf32>, vector<1x8x8x384xf32>, vector<1x1x8x384xf32> -> vector<1x10x8x384xf32>
    %c1_i32 = arith.constant 1 : i32
    %14 = tpu.dynamic_rotate %13 by %c1_i32 dim 2 : vector<1x10x8x384xf32>, i32 -> vector<1x10x8x384xf32>
    %c7_i32 = arith.constant 7 : i32
    %15 = tpu.dynamic_rotate %13 by %c7_i32 dim 2 : vector<1x10x8x384xf32>, i32 -> vector<1x10x8x384xf32>
    %c0_12 = arith.constant 0 : index
    %c0_13 = arith.constant 0 : index
    %c0_14 = arith.constant 0 : index
    %16 = vector.load %arg6[%c0_12, %c0_13, %c0_14] : memref<3x3x384xf32, #tpu.memory_space<vmem>>, vector<3x3x384xf32>
    %17 = tpu.iota {dimensions = array<i32: 2>} : vector<1x1x8x384xi32>
    %c1_i32_15 = arith.constant 1 : i32
    %18 = vector.broadcast %c1_i32_15 : i32 to vector<1x1x8x384xi32>
    %19 = arith.cmpi sge, %17, %18 : vector<1x1x8x384xi32>
    %20 = arith.extui %19 : vector<1x1x8x384xi1> to vector<1x1x8x384xi32>
    %21 = arith.sitofp %20 : vector<1x1x8x384xi32> to vector<1x1x8x384xf32>
    %c6_i32 = arith.constant 6 : i32
    %22 = vector.broadcast %c6_i32 : i32 to vector<1x1x8x384xi32>
    %23 = arith.cmpi sle, %17, %22 : vector<1x1x8x384xi32>
    %24 = arith.extui %23 : vector<1x1x8x384xi1> to vector<1x1x8x384xi32>
    %25 = arith.sitofp %24 : vector<1x1x8x384xi32> to vector<1x1x8x384xf32>
    %cst = arith.constant 0.000000e+00 : f32
    %26 = vector.broadcast %cst : f32 to vector<1x8x8x384xf32>
    %c0_16 = arith.constant 0 : index
    %c0_17 = arith.constant 0 : index
    %27 = vector.load %arg7[%c0_16, %c0_17] : memref<1x384xf32, #tpu.memory_space<vmem>>, vector<1x384xf32>
    %28 = vector.shape_cast %27 : vector<1x384xf32> to vector<384xf32>
    %29 = vector.shape_cast %28 : vector<384xf32> to vector<1x1x1x384xf32>
    %30 = vector.broadcast %29 : vector<1x1x1x384xf32> to vector<1x8x8x384xf32>
    %31 = arith.addf %26, %30 : vector<1x8x8x384xf32>
    %32 = vector.extract_strided_slice %13 {offsets = [0, 0, 0, 0], sizes = [1, 8, 8, 384], strides = [1, 1, 1, 1]} : vector<1x10x8x384xf32> to vector<1x8x8x384xf32>
    %33 = vector.extract_strided_slice %16 {offsets = [0, 1, 0], sizes = [1, 1, 384], strides = [1, 1, 1]} : vector<3x3x384xf32> to vector<1x1x384xf32>
    %34 = vector.shape_cast %33 : vector<1x1x384xf32> to vector<384xf32>
    %35 = vector.shape_cast %34 : vector<384xf32> to vector<1x1x1x384xf32>
    %36 = vector.broadcast %35 : vector<1x1x1x384xf32> to vector<1x8x8x384xf32>
    %37 = arith.mulf %32, %36 : vector<1x8x8x384xf32>
    %38 = arith.addf %31, %37 : vector<1x8x8x384xf32>
    %39 = vector.extract_strided_slice %14 {offsets = [0, 0, 0, 0], sizes = [1, 8, 8, 384], strides = [1, 1, 1, 1]} : vector<1x10x8x384xf32> to vector<1x8x8x384xf32>
    %40 = vector.extract_strided_slice %16 {offsets = [0, 0, 0], sizes = [1, 1, 384], strides = [1, 1, 1]} : vector<3x3x384xf32> to vector<1x1x384xf32>
    %41 = vector.shape_cast %40 : vector<1x1x384xf32> to vector<384xf32>
    %42 = vector.shape_cast %41 : vector<384xf32> to vector<1x1x1x384xf32>
    %43 = vector.broadcast %42 : vector<1x1x1x384xf32> to vector<1x1x8x384xf32>
    %44 = arith.mulf %21, %43 : vector<1x1x8x384xf32>
    %45 = vector.broadcast %44 : vector<1x1x8x384xf32> to vector<1x8x8x384xf32>
    %46 = arith.mulf %39, %45 : vector<1x8x8x384xf32>
    %47 = arith.addf %38, %46 : vector<1x8x8x384xf32>
    %48 = vector.extract_strided_slice %15 {offsets = [0, 0, 0, 0], sizes = [1, 8, 8, 384], strides = [1, 1, 1, 1]} : vector<1x10x8x384xf32> to vector<1x8x8x384xf32>
    %49 = vector.extract_strided_slice %16 {offsets = [0, 2, 0], sizes = [1, 1, 384], strides = [1, 1, 1]} : vector<3x3x384xf32> to vector<1x1x384xf32>
    %50 = vector.shape_cast %49 : vector<1x1x384xf32> to vector<384xf32>
    %51 = vector.shape_cast %50 : vector<384xf32> to vector<1x1x1x384xf32>
    %52 = vector.broadcast %51 : vector<1x1x1x384xf32> to vector<1x1x8x384xf32>
    %53 = arith.mulf %25, %52 : vector<1x1x8x384xf32>
    %54 = vector.broadcast %53 : vector<1x1x8x384xf32> to vector<1x8x8x384xf32>
    %55 = arith.mulf %48, %54 : vector<1x8x8x384xf32>
    %56 = arith.addf %47, %55 : vector<1x8x8x384xf32>
    %57 = vector.extract_strided_slice %13 {offsets = [0, 1, 0, 0], sizes = [1, 8, 8, 384], strides = [1, 1, 1, 1]} : vector<1x10x8x384xf32> to vector<1x8x8x384xf32>
    %58 = vector.extract_strided_slice %16 {offsets = [1, 1, 0], sizes = [1, 1, 384], strides = [1, 1, 1]} : vector<3x3x384xf32> to vector<1x1x384xf32>
    %59 = vector.shape_cast %58 : vector<1x1x384xf32> to vector<384xf32>
    %60 = vector.shape_cast %59 : vector<384xf32> to vector<1x1x1x384xf32>
    %61 = vector.broadcast %60 : vector<1x1x1x384xf32> to vector<1x8x8x384xf32>
    %62 = arith.mulf %57, %61 : vector<1x8x8x384xf32>
    %63 = arith.addf %56, %62 : vector<1x8x8x384xf32>
    %64 = vector.extract_strided_slice %14 {offsets = [0, 1, 0, 0], sizes = [1, 8, 8, 384], strides = [1, 1, 1, 1]} : vector<1x10x8x384xf32> to vector<1x8x8x384xf32>
    %65 = vector.extract_strided_slice %16 {offsets = [1, 0, 0], sizes = [1, 1, 384], strides = [1, 1, 1]} : vector<3x3x384xf32> to vector<1x1x384xf32>
    %66 = vector.shape_cast %65 : vector<1x1x384xf32> to vector<384xf32>
    %67 = vector.shape_cast %66 : vector<384xf32> to vector<1x1x1x384xf32>
    %68 = vector.broadcast %67 : vector<1x1x1x384xf32> to vector<1x1x8x384xf32>
    %69 = arith.mulf %21, %68 : vector<1x1x8x384xf32>
    %70 = vector.broadcast %69 : vector<1x1x8x384xf32> to vector<1x8x8x384xf32>
    %71 = arith.mulf %64, %70 : vector<1x8x8x384xf32>
    %72 = arith.addf %63, %71 : vector<1x8x8x384xf32>
    %73 = vector.extract_strided_slice %15 {offsets = [0, 1, 0, 0], sizes = [1, 8, 8, 384], strides = [1, 1, 1, 1]} : vector<1x10x8x384xf32> to vector<1x8x8x384xf32>
    %74 = vector.extract_strided_slice %16 {offsets = [1, 2, 0], sizes = [1, 1, 384], strides = [1, 1, 1]} : vector<3x3x384xf32> to vector<1x1x384xf32>
    %75 = vector.shape_cast %74 : vector<1x1x384xf32> to vector<384xf32>
    %76 = vector.shape_cast %75 : vector<384xf32> to vector<1x1x1x384xf32>
    %77 = vector.broadcast %76 : vector<1x1x1x384xf32> to vector<1x1x8x384xf32>
    %78 = arith.mulf %25, %77 : vector<1x1x8x384xf32>
    %79 = vector.broadcast %78 : vector<1x1x8x384xf32> to vector<1x8x8x384xf32>
    %80 = arith.mulf %73, %79 : vector<1x8x8x384xf32>
    %81 = arith.addf %72, %80 : vector<1x8x8x384xf32>
    %82 = vector.extract_strided_slice %13 {offsets = [0, 2, 0, 0], sizes = [1, 8, 8, 384], strides = [1, 1, 1, 1]} : vector<1x10x8x384xf32> to vector<1x8x8x384xf32>
    %83 = vector.extract_strided_slice %16 {offsets = [2, 1, 0], sizes = [1, 1, 384], strides = [1, 1, 1]} : vector<3x3x384xf32> to vector<1x1x384xf32>
    %84 = vector.shape_cast %83 : vector<1x1x384xf32> to vector<384xf32>
    %85 = vector.shape_cast %84 : vector<384xf32> to vector<1x1x1x384xf32>
    %86 = vector.broadcast %85 : vector<1x1x1x384xf32> to vector<1x8x8x384xf32>
    %87 = arith.mulf %82, %86 : vector<1x8x8x384xf32>
    %88 = arith.addf %81, %87 : vector<1x8x8x384xf32>
    %89 = vector.extract_strided_slice %14 {offsets = [0, 2, 0, 0], sizes = [1, 8, 8, 384], strides = [1, 1, 1, 1]} : vector<1x10x8x384xf32> to vector<1x8x8x384xf32>
    %90 = vector.extract_strided_slice %16 {offsets = [2, 0, 0], sizes = [1, 1, 384], strides = [1, 1, 1]} : vector<3x3x384xf32> to vector<1x1x384xf32>
    %91 = vector.shape_cast %90 : vector<1x1x384xf32> to vector<384xf32>
    %92 = vector.shape_cast %91 : vector<384xf32> to vector<1x1x1x384xf32>
    %93 = vector.broadcast %92 : vector<1x1x1x384xf32> to vector<1x1x8x384xf32>
    %94 = arith.mulf %21, %93 : vector<1x1x8x384xf32>
    %95 = vector.broadcast %94 : vector<1x1x8x384xf32> to vector<1x8x8x384xf32>
    %96 = arith.mulf %89, %95 : vector<1x8x8x384xf32>
    %97 = arith.addf %88, %96 : vector<1x8x8x384xf32>
    %98 = vector.extract_strided_slice %15 {offsets = [0, 2, 0, 0], sizes = [1, 8, 8, 384], strides = [1, 1, 1, 1]} : vector<1x10x8x384xf32> to vector<1x8x8x384xf32>
    %99 = vector.extract_strided_slice %16 {offsets = [2, 2, 0], sizes = [1, 1, 384], strides = [1, 1, 1]} : vector<3x3x384xf32> to vector<1x1x384xf32>
    %100 = vector.shape_cast %99 : vector<1x1x384xf32> to vector<384xf32>
    %101 = vector.shape_cast %100 : vector<384xf32> to vector<1x1x1x384xf32>
    %102 = vector.broadcast %101 : vector<1x1x1x384xf32> to vector<1x1x8x384xf32>
    %103 = arith.mulf %25, %102 : vector<1x1x8x384xf32>
    %104 = vector.broadcast %103 : vector<1x1x8x384xf32> to vector<1x8x8x384xf32>
    %105 = arith.mulf %98, %104 : vector<1x8x8x384xf32>
    %106 = arith.addf %97, %105 : vector<1x8x8x384xf32>
    %c0_18 = arith.constant 0 : index
    %c0_19 = arith.constant 0 : index
    %c0_20 = arith.constant 0 : index
    %c0_21 = arith.constant 0 : index
    %107 = vector.load %arg8[%c0_18, %c0_19, %c0_20, %c0_21] : memref<1x8x8x384xf32, #tpu.memory_space<vmem>>, vector<1x8x8x384xf32>
    tpu.vector_store %arg8[%c0_18, %c0_19, %c0_20, %c0_21], %106 {strides = array<i32>} : memref<1x8x8x384xf32, #tpu.memory_space<vmem>>, vector<1x8x8x384xf32>,
    return
  }
  func.func @transform_0(%arg0: i32, %arg1: i32, %arg2: i32) -> (i32, i32, i32, i32) {
    %c0_i32 = arith.constant 0 : i32
    %c0_i32_0 = arith.constant 0 : i32
    return %arg1, %arg2, %c0_i32, %arg0 : i32, i32, i32, i32
  }
  func.func @transform_1(%arg0: i32, %arg1: i32, %arg2: i32) -> (i32, i32, i32, i32) {
    %c8_i32 = arith.constant 8 : i32
    %0 = arith.muli %arg2, %c8_i32 : i32
    %c1_i32 = arith.constant 1 : i32
    %1 = arith.subi %0, %c1_i32 : i32
    %c0_i32 = arith.constant 0 : i32
    %2 = arith.maxsi %1, %c0_i32 : i32
    %c0_i32_0 = arith.constant 0 : i32
    %c0_i32_1 = arith.constant 0 : i32
    return %arg1, %2, %c0_i32_0, %arg0 : i32, i32, i32, i32
  }
  func.func @transform_2(%arg0: i32, %arg1: i32, %arg2: i32) -> (i32, i32, i32, i32) {
    %c8_i32 = arith.constant 8 : i32
    %0 = arith.muli %arg2, %c8_i32 : i32
    %c8_i32_0 = arith.constant 8 : i32
    %1 = arith.addi %0, %c8_i32_0 : i32
    %c7_i32 = arith.constant 7 : i32
    %2 = arith.minsi %1, %c7_i32 : i32
    %c0_i32 = arith.constant 0 : i32
    %c0_i32_1 = arith.constant 0 : i32
    return %arg1, %2, %c0_i32, %arg0 : i32, i32, i32, i32
  }
  func.func @transform_3(%arg0: i32, %arg1: i32, %arg2: i32) -> (i32, i32, i32) {
    %c0_i32 = arith.constant 0 : i32
    %c0_i32_0 = arith.constant 0 : i32
    %c0_i32_1 = arith.constant 0 : i32
    return %c0_i32, %c0_i32_0, %arg0 : i32, i32, i32
  }
  func.func @transform_4(%arg0: i32, %arg1: i32, %arg2: i32) -> (i32, i32) {
    %c0_i32 = arith.constant 0 : i32
    %c0_i32_0 = arith.constant 0 : i32
    return %c0_i32, %arg0 : i32, i32
  }
  func.func @transform_5(%arg0: i32, %arg1: i32, %arg2: i32) -> (i32, i32, i32, i32) {
    %c0_i32 = arith.constant 0 : i32
    %c0_i32_0 = arith.constant 0 : i32
    return %arg1, %arg2, %c0_i32, %arg0 : i32, i32, i32, i32
  }
}

</mosaic_0001>

<llo_original>
// kernel: tpu_custom_call.1
$region0: #{tpu_custom_call.1}
  #allocation0 [shape = 'u32[]', space=smem, size = 0x4, offset = 0x4, fixed_abs, tag = 'smem constant byte address 0x4 - core index']
  #allocation1 [shape = 'u32[144,128]{1,0:T(1,128)}', space=vmem, size = 0x12000, scoped, tag = 'internal scratch']
  %s0 = inlined_call_operand.hbm [shape: f32[2,8,8,384], index: 0, kind: input, shape index: {}]
  %s1 = inlined_call_operand.hbm [shape: f32[2,8,8,384], index: 1, kind: input, shape index: {}]
  %s2 = inlined_call_operand.hbm [shape: f32[2,8,8,384], index: 2, kind: input, shape index: {}]
  %s3 = inlined_call_operand.hbm [shape: f32[3,3,384], index: 3, kind: input, shape index: {}]
  %s4 = inlined_call_operand.vmem [shape: f32[1,384], index: 4, kind: input, shape index: {}]
  %s5 = inlined_call_operand.hbm [shape: f32[2,8,8,384], index: 5, kind: output, shape index: {}]
  %s6 = sld [smem:[#allocation0]]
  $region69: #{tpu_custom_call.1} parent=0
    _
  %s8 = ssub.s32 1, %s6
  %s9 = scalar_select 0, %s8, %s6
  $region1: #{tpu_custom_call.1} parent=0
    #allocation2 [shape = 'u8[196608]{0}', space=vmem, size = 0x30000, scoped, tag = 'input window, operand 0']
    #allocation3 [shape = 's32[2]{0}', space=sflag, size = 0x8, scoped, tag = 'scoped memory for tpu_custom_call.1']
    #allocation4 [shape = 's32[2]{0}', space=sflag, size = 0x8, scoped, tag = 'scoped memory for tpu_custom_call.1']
    #allocation5 [shape = 'u8[24576]{0}', space=vmem, size = 0x6000, scoped, tag = 'input window, operand 1']
    #allocation6 [shape = 's32[2]{0}', space=sflag, size = 0x8, scoped, tag = 'scoped memory for tpu_custom_call.1']
    #allocation7 [shape = 'u8[24576]{0}', space=vmem, size = 0x6000, scoped, tag = 'input window, operand 2']
    #allocation8 [shape = 'u8[18432]{0}', space=vmem, size = 0x4800, scoped, tag = 'input window, operand 3, single buffered']
    #allocation9 [shape = 's32[1]{0}', space=sflag, size = 0x4, scoped, tag = 'scoped memory for tpu_custom_call.1']
    #allocation10 [shape = 'u8[196608]{0}', space=vmem, size = 0x30000, scoped, tag = 'output window, operand 0']
    %10 = vsyncpa [#allocation3], 0
    %s11 = scalar_lea.sflag [#allocation3], 1
    %12 = vsyncpa %s11, 0
    %13 = vsyncpa [#allocation6], 0
    %s14 = scalar_lea.sflag [#allocation6], 1
    %15 = vsyncpa %s14, 0
    %16 = vsyncpa [#allocation9], 0
    %17 = vsyncpa [#allocation4], 0
    %s18 = scalar_lea.sflag [#allocation4], 1
    %19 = vsyncpa %s18, 0
    loop: start=0, step=1, limit=4
    $region2: #{tpu_custom_call.1} parent=1 // loop_pre_header
      _
    $region3: #{tpu_custom_call.1} parent=1 // loop_header
      %s21 = sphi 0, %s25
      %p22 = scmp.ge.s32.totalorder %s21, 4
      %s28 = sphi 0, %s47
      %s29 = sphi 0, %s43
      %s30 = sphi 0, %s39
      %s31 = sphi 0, %s28
      %s32 = sphi 0, %s29
      %s33 = sphi 0, %s30
      %s34 = sphi 0, %s31
      %s35 = sphi 0, %s32
      %s36 = sphi 0, %s33
      %s54 = sphi 0, %s56
      %s57 = sphi 0, %s54
      %s58 = sphi 0, %s57
      %s74 = sphi 0, %s58
      %s92 = sphi 0, %s94
      %s95 = sphi 0, %s92
      %s96 = sphi 0, %s95
      %s112 = sphi 0, %s96
      %s130 = sphi 0, %s132
      %s133 = sphi 0, %s130
      %s134 = sphi 0, %s133
      %s150 = sphi 0, %s134
      %s156 = sphi 0, %s158
      %s159 = sphi 0, %s156
      %s160 = sphi 0, %s159
      %s176 = sphi 0, %s160
      %s182 = sphi 0, %s184
      %s185 = sphi 0, %s182
      %s186 = sphi 0, %s185
      %s202 = sphi 0, %s186
      %s212 = sphi 0, %s214
      %s215 = sphi 0, %s212
      %s216 = sphi 0, %s215
      %s232 = sphi 0, %s216
    $region4: #{tpu_custom_call.1} parent=1 // loop_header_branch
      %24 = sbr.rel (%p22) target = $region8
    $region5: #{tpu_custom_call.1} parent=1 // loop_body
      %s26 = ssub.s32 %s21, 1
      %s27 = ssub.s32 %s21, 2
      %s37 = sadd.s32 1, %s30
      %p38 = scmp.ge.s32.totalorder %s37, 1
      %s39 = scalar_select %p38, 0, %s37
      %s40 = sadd.s32 1, %s29
      %s41 = scalar_select %p38, %s40, %s29
      %p42 = scmp.ge.s32.totalorder %s41, 2
      %s43 = scalar_select %p42, 0, %s41
      %s44 = sadd.s32 1, %s28
      %s45 = scalar_select %p42, %s44, %s28
      %p46 = scmp.ge.s32.totalorder %s45, 1
      %s47 = scalar_select %p46, 0, %s45
      %s48 = ssub.s32 %s29, %s43
      %s49 = ssub.s32 %s30, %s39
      %s50 = sor.u32 %s48, %s49
      %s51 = ssub.s32 %s28, %s47
      %s52 = sor.u32 %s50, %s51
      %p53 = scmp.eq.s32.totalorder %s52, 0
      %s55 = sadd.s32 %s54, 1
      %s56 = scalar_select %p53, %s54, %s55
      %p59 = pneg %p53
      %p60 = scmp.eq.s32.totalorder %s21, 1
      %p61 = por %p59, %p60
      %p62 = scmp.ne.s32.totalorder %s54, %s57
      %p63 = scmp.eq.s32.totalorder %s21, 0
      %p64 = por %p62, %p63
      %p65 = scmp.ne.s32.totalorder %s54, %s57
      %p66 = scmp.eq.s32.totalorder %s26, 1
      %p67 = por %p65, %p66
      %p68 = scmp.ne.s32.totalorder %s57, %s58
      %p69 = scmp.eq.s32.totalorder %s26, 0
      %p70 = por %p68, %p69
      %p71 = scmp.ne.s32.totalorder %s57, %s58
      %p72 = scmp.eq.s32.totalorder %s27, 1
      %p73 = por %p71, %p72
      %p75 = scmp.ne.s32.totalorder %s58, %s74
      %p76 = scmp.eq.s32.totalorder %s27, 0
      %p77 = por %p75, %p76
      %s78 = smul.u32 %s30, 8
      %s79 = ssub.s32 %s78, 1
      %p80 = scmp.gt.s32.totalorder %s79, 0
      %s81 = scalar_select %p80, %s79, 0
      %s82 = smul.u32 %s39, 8
      %s83 = ssub.s32 %s82, 1
      %p84 = scmp.gt.s32.totalorder %s83, 0
      %s85 = scalar_select %p84, %s83, 0
      %s86 = ssub.s32 %s29, %s43
      %s87 = ssub.s32 %s81, %s85
      %s88 = sor.u32 %s86, %s87
      %s89 = ssub.s32 %s28, %s47
      %s90 = sor.u32 %s88, %s89
      %p91 = scmp.eq.s32.totalorder %s90, 0
      %s93 = sadd.s32 %s92, 1
      %s94 = scalar_select %p91, %s92, %s93
      %p97 = pneg %p91
      %p98 = scmp.eq.s32.totalorder %s21, 1
      %p99 = por %p97, %p98
      %p100 = scmp.ne.s32.totalorder %s92, %s95
      %p101 = scmp.eq.s32.totalorder %s21, 0
      %p102 = por %p100, %p101
      %p103 = scmp.ne.s32.totalorder %s92, %s95
      %p104 = scmp.eq.s32.totalorder %s26, 1
      %p105 = por %p103, %p104
      %p106 = scmp.ne.s32.totalorder %s95, %s96
      %p107 = scmp.eq.s32.totalorder %s26, 0
      %p108 = por %p106, %p107
      %p109 = scmp.ne.s32.totalorder %s95, %s96
      %p110 = scmp.eq.s32.totalorder %s27, 1
      %p111 = por %p109, %p110
      %p113 = scmp.ne.s32.totalorder %s96, %s112
      %p114 = scmp.eq.s32.totalorder %s27, 0
      %p115 = por %p113, %p114
      %s116 = smul.u32 %s30, 8
      %s117 = sadd.s32 %s116, 8
      %p118 = scmp.lt.s32.totalorder %s117, 7
      %s119 = scalar_select %p118, %s117, 7
      %s120 = smul.u32 %s39, 8
      %s121 = sadd.s32 %s120, 8
      %p122 = scmp.lt.s32.totalorder %s121, 7
      %s123 = scalar_select %p122, %s121, 7
      %s124 = ssub.s32 %s29, %s43
      %s125 = ssub.s32 %s119, %s123
      %s126 = sor.u32 %s124, %s125
      %s127 = ssub.s32 %s28, %s47
      %s128 = sor.u32 %s126, %s127
      %p129 = scmp.eq.s32.totalorder %s128, 0
      %s131 = sadd.s32 %s130, 1
      %s132 = scalar_select %p129, %s130, %s131
      %p135 = pneg %p129
      %p136 = scmp.eq.s32.totalorder %s21, 1
      %p137 = por %p135, %p136
      %p138 = scmp.ne.s32.totalorder %s130, %s133
      %p139 = scmp.eq.s32.totalorder %s21, 0
      %p140 = por %p138, %p139
      %p141 = scmp.ne.s32.totalorder %s130, %s133
      %p142 = scmp.eq.s32.totalorder %s26, 1
      %p143 = por %p141, %p142
      %p144 = scmp.ne.s32.totalorder %s133, %s134
      %p145 = scmp.eq.s32.totalorder %s26, 0
      %p146 = por %p144, %p145
      %p147 = scmp.ne.s32.totalorder %s133, %s134
      %p148 = scmp.eq.s32.totalorder %s27, 1
      %p149 = por %p147, %p148
      %p151 = scmp.ne.s32.totalorder %s134, %s150
      %p152 = scmp.eq.s32.totalorder %s27, 0
      %p153 = por %p151, %p152
      %s154 = ssub.s32 %s28, %s47
      %p155 = scmp.eq.s32.totalorder %s154, 0
      %s157 = sadd.s32 %s156, 1
      %s158 = scalar_select %p155, %s156, %s157
      %p161 = pneg %p155
      %p162 = scmp.eq.s32.totalorder %s21, 1
      %p163 = por %p161, %p162
      %p164 = scmp.ne.s32.totalorder %s156, %s159
      %p165 = scmp.eq.s32.totalorder %s21, 0
      %p166 = por %p164, %p165
      %p167 = scmp.ne.s32.totalorder %s156, %s159
      %p168 = scmp.eq.s32.totalorder %s26, 1
      %p169 = por %p167, %p168
      %p170 = scmp.ne.s32.totalorder %s159, %s160
      %p171 = scmp.eq.s32.totalorder %s26, 0
      %p172 = por %p170, %p171
      %p173 = scmp.ne.s32.totalorder %s159, %s160
      %p174 = scmp.eq.s32.totalorder %s27, 1
      %p175 = por %p173, %p174
      %p177 = scmp.ne.s32.totalorder %s160, %s176
      %p178 = scmp.eq.s32.totalorder %s27, 0
      %p179 = por %p177, %p178
      %s180 = ssub.s32 %s28, %s47
      %p181 = scmp.eq.s32.totalorder %s180, 0
      %s183 = sadd.s32 %s182, 1
      %s184 = scalar_select %p181, %s182, %s183
      %p187 = pneg %p181
      %p188 = scmp.eq.s32.totalorder %s21, 1
      %p189 = por %p187, %p188
      %p190 = scmp.ne.s32.totalorder %s182, %s185
      %p191 = scmp.eq.s32.totalorder %s21, 0
      %p192 = por %p190, %p191
      %p193 = scmp.ne.s32.totalorder %s182, %s185
      %p194 = scmp.eq.s32.totalorder %s26, 1
      %p195 = por %p193, %p194
      %p196 = scmp.ne.s32.totalorder %s185, %s186
      %p197 = scmp.eq.s32.totalorder %s26, 0
      %p198 = por %p196, %p197
      %p199 = scmp.ne.s32.totalorder %s185, %s186
      %p200 = scmp.eq.s32.totalorder %s27, 1
      %p201 = por %p199, %p200
      %p203 = scmp.ne.s32.totalorder %s186, %s202
      %p204 = scmp.eq.s32.totalorder %s27, 0
      %p205 = por %p203, %p204
      %s206 = ssub.s32 %s29, %s43
      %s207 = ssub.s32 %s30, %s39
      %s208 = sor.u32 %s206, %s207
      %s209 = ssub.s32 %s28, %s47
      %s210 = sor.u32 %s208, %s209
      %p211 = scmp.eq.s32.totalorder %s210, 0
      %s213 = sadd.s32 %s212, 1
      %s214 = scalar_select %p211, %s212, %s213
      %p217 = pneg %p211
      %p218 = scmp.eq.s32.totalorder %s21, 1
      %p219 = por %p217, %p218
      %p220 = scmp.ne.s32.totalorder %s212, %s215
      %p221 = scmp.eq.s32.totalorder %s21, 0
      %p222 = por %p220, %p221
      %p223 = scmp.ne.s32.totalorder %s212, %s215
      %p224 = scmp.eq.s32.totalorder %s26, 1
      %p225 = por %p223, %p224
      %p226 = scmp.ne.s32.totalorder %s215, %s216
      %p227 = scmp.eq.s32.totalorder %s26, 0
      %p228 = por %p226, %p227
      %p229 = scmp.ne.s32.totalorder %s215, %s216
      %p230 = scmp.eq.s32.totalorder %s27, 1
      %p231 = por %p229, %p230
      %p233 = scmp.ne.s32.totalorder %s216, %s232
      %p234 = scmp.eq.s32.totalorder %s27, 0
      %p235 = por %p233, %p234
      %p236 = scmp.le.s32.totalorder 1, %s21
      %p237 = scmp.lt.s32.totalorder %s21, 3
      %p238 = pnand %p236, %p237
      %p239 = pneg %p238
      // Predicated region
      $region9: #{tpu_custom_call.1} parent=5 // pred_check
        _
      $region10: #{tpu_custom_call.1} parent=5 // pred_check_branch
        %241 = sbr.rel (%p238) target = $region12
      $region11: #{tpu_custom_call.1} parent=5 // pred_region
        %s242 = ssub.s32 %s21, 1
        // Predicated region
        $region13: #{tpu_custom_call.1} parent=11 // pred_check
          %p243 = pneg %p172
        $region14: #{tpu_custom_call.1} parent=11 // pred_check_branch
          %245 = sbr.rel (%p243) target = $region16
        $region15: #{tpu_custom_call.1} parent=11 // pred_region
          %s246 = smul.u32 3, %s31
          %s248 = ssub.s32 576, 576
          %249 = vsyncadd [#allocation9], %s248
          %s250 = smul.addr %s246, 64
          %s251 = scalar_lea.hbm %s3, %s250
          %s252 = sshll.u32 [#allocation8], 4
          %s253 = int_to_ptr.vmem [resolvable:$true] %s252
          %258 = dma.hbm_to_vmem [thread:$0]  %s251, 576, %s253, [#allocation9], 192, 192, 12
        $region16: #{tpu_custom_call.1} parent=11 // pred_fallthru
          _
        // Predicated region
        $region17: #{tpu_custom_call.1} parent=11 // pred_check
          %p259 = pneg %p198
        $region18: #{tpu_custom_call.1} parent=11 // pred_check_branch
          %261 = sbr.rel (%p259) target = $region20
        $region19: #{tpu_custom_call.1} parent=11 // pred_region
          %s262 = smul.u32 3, %s31
          %p263 = scmp.lt.s32.totalorder %s262, 2
          %s264 = scalar_select %p263, %s262, 2
          %s265 = scalar_lea.vmem %s4, %s264
          %s266 = smul.u32 3, %s31
        $region20: #{tpu_custom_call.1} parent=11 // pred_fallthru
          _
      $region12: #{tpu_custom_call.1} parent=5 // pred_fallthru
        _
      %p267 = scmp.lt.s32.totalorder %s21, 2
      // Predicated region
      $region21: #{tpu_custom_call.1} parent=5 // pred_check
        %p268 = pneg %p267
      $region22: #{tpu_custom_call.1} parent=5 // pred_check_branch
        %270 = sbr.rel (%p268) target = $region24
      $region23: #{tpu_custom_call.1} parent=5 // pred_region
        // Predicated region
        $region25: #{tpu_custom_call.1} parent=23 // pred_check
          %p271 = pneg %p64
        $region26: #{tpu_custom_call.1} parent=23 // pred_check_branch
          %273 = sbr.rel (%p271) target = $region28
        $region27: #{tpu_custom_call.1} parent=23 // pred_region
          %s274 = sand.u32 %s54, 1
          %s275 = scalar_lea.sflag [#allocation3], %s274
          %s276 = sand.u32 %s54, 1
          %s277 = smul.addr %s276, 192
          %s278 = scalar_lea.vmem [#allocation2], %s277
          %s279 = smul.u32 8, %s30
          %s280 = smul.u32 3, %s28
          %s282 = ssub.s32 3072, 3072
          %283 = vsyncadd %s275, %s282
          %s284 = smul.addr %s279, 3
          %s285 = sadd.s32 %s280, %s284
          %s286 = smul.addr %s29, 24
          %s287 = sadd.s32 %s285, %s286
          %s288 = smul.addr %s287, 128
          %s289 = scalar_lea.hbm %s0, %s288
          %s290 = sshll.u32 %s278, 4
          %s291 = int_to_ptr.vmem [resolvable:$true] %s290
          %296 = dma.hbm_to_vmem [thread:$0]  %s289, 3072, %s291, %s275, 384, 384, 24
        $region28: #{tpu_custom_call.1} parent=23 // pred_fallthru
          _
        // Predicated region
        $region29: #{tpu_custom_call.1} parent=23 // pred_check
          %p297 = pneg %p102
        $region30: #{tpu_custom_call.1} parent=23 // pred_check_branch
          %299 = sbr.rel (%p297) target = $region32
        $region31: #{tpu_custom_call.1} parent=23 // pred_region
          %s300 = sand.u32 %s21, 1
          %s301 = scalar_lea.sflag [#allocation6], %s300
          %s302 = sand.u32 %s92, 1
          %s303 = smul.addr %s302, 24
          %s304 = scalar_lea.vmem [#allocation5], %s303
          %s305 = smul.u32 %s30, 8
          %s306 = ssub.s32 %s305, 1
          %p307 = scmp.gt.s32.totalorder %s306, 0
          %s308 = scalar_select %p307, %s306, 0
          %s309 = smul.u32 3, %s28
          %s311 = ssub.s32 384, 384
          %312 = vsyncadd %s301, %s311
          %s313 = smul.addr %s308, 3
          %s314 = sadd.s32 %s309, %s313
          %s315 = smul.addr %s29, 24
          %s316 = sadd.s32 %s314, %s315
          %s317 = smul.addr %s316, 128
          %s318 = scalar_lea.hbm %s1, %s317
          %s320 = sshll.u32 %s304, 4
          %s321 = int_to_ptr.vmem [resolvable:$true] %s320
          %323 = dma.hbm_to_vmem [thread:$0]  %s318, 384, %s321, %s301
        $region32: #{tpu_custom_call.1} parent=23 // pred_fallthru
          _
        // Predicated region
        $region33: #{tpu_custom_call.1} parent=23 // pred_check
          %p324 = pneg %p140
        $region34: #{tpu_custom_call.1} parent=23 // pred_check_branch
          %326 = sbr.rel (%p324) target = $region36
        $region35: #{tpu_custom_call.1} parent=23 // pred_region
          %s327 = sand.u32 %s21, 1
          %s328 = scalar_lea.sflag [#allocation6], %s327
          %s329 = sand.u32 %s130, 1
          %s330 = smul.addr %s329, 24
          %s331 = scalar_lea.vmem [#allocation7], %s330
          %s332 = smul.u32 %s30, 8
          %s333 = sadd.s32 %s332, 8
          %p334 = scmp.lt.s32.totalorder %s333, 7
          %s335 = scalar_select %p334, %s333, 7
          %s336 = smul.u32 3, %s28
          %s338 = ssub.s32 384, 384
          %339 = vsyncadd %s328, %s338
          %s340 = smul.addr %s335, 3
          %s341 = sadd.s32 %s336, %s340
          %s342 = smul.addr %s29, 24
          %s343 = sadd.s32 %s341, %s342
          %s344 = smul.addr %s343, 128
          %s345 = scalar_lea.hbm %s2, %s344
          %s347 = sshll.u32 %s331, 4
          %s348 = int_to_ptr.vmem [resolvable:$true] %s347
          %350 = dma.hbm_to_vmem [thread:$0]  %s345, 384, %s348, %s328
        $region36: #{tpu_custom_call.1} parent=23 // pred_fallthru
          _
      $region24: #{tpu_custom_call.1} parent=5 // pred_fallthru
        _
      %p351 = scmp.le.s32.totalorder 1, %s21
      %p352 = scmp.lt.s32.totalorder %s21, 3
      %p353 = pnand %p351, %p352
      %p354 = pneg %p353
      // Predicated region
      $region37: #{tpu_custom_call.1} parent=5 // pred_check
        _
      $region38: #{tpu_custom_call.1} parent=5 // pred_check_branch
        %356 = sbr.rel (%p353) target = $region40
      $region39: #{tpu_custom_call.1} parent=5 // pred_region
        %s357 = ssub.s32 %s21, 1
        %s358 = sand.u32 %s57, 1
        %s359 = scalar_lea.sflag [#allocation3], %s358
        %s360 = sand.u32 %s57, 1
        %s361 = smul.addr %s360, 192
        %s362 = scalar_lea.vmem [#allocation2], %s361
        // Predicated region
        $region41: #{tpu_custom_call.1} parent=39 // pred_check
          %p363 = pneg %p70
        $region42: #{tpu_custom_call.1} parent=39 // pred_check_branch
          %365 = sbr.rel (%p363) target = $region44
        $region43: #{tpu_custom_call.1} parent=39 // pred_region
          %366 = dma.done %s359, 3072
        $region44: #{tpu_custom_call.1} parent=39 // pred_fallthru
          _
        %s367 = sand.u32 %s26, 1
        %s368 = scalar_lea.sflag [#allocation6], %s367
        %s369 = sand.u32 %s95, 1
        %s370 = smul.addr %s369, 24
        %s371 = scalar_lea.vmem [#allocation5], %s370
        // Predicated region
        $region45: #{tpu_custom_call.1} parent=39 // pred_check
          %p372 = pneg %p108
        $region46: #{tpu_custom_call.1} parent=39 // pred_check_branch
          %374 = sbr.rel (%p372) target = $region48
        $region47: #{tpu_custom_call.1} parent=39 // pred_region
          %375 = dma.done %s368, 384
        $region48: #{tpu_custom_call.1} parent=39 // pred_fallthru
          _
        %s376 = sand.u32 %s26, 1
        %s377 = scalar_lea.sflag [#allocation6], %s376
        %s378 = sand.u32 %s133, 1
        %s379 = smul.addr %s378, 24
        %s380 = scalar_lea.vmem [#allocation7], %s379
        // Predicated region
        $region49: #{tpu_custom_call.1} parent=39 // pred_check
          %p381 = pneg %p146
        $region50: #{tpu_custom_call.1} parent=39 // pred_check_branch
          %383 = sbr.rel (%p381) target = $region52
        $region51: #{tpu_custom_call.1} parent=39 // pred_region
          %384 = dma.done %s377, 384
        $region52: #{tpu_custom_call.1} parent=39 // pred_fallthru
          _
        // Predicated region
        $region53: #{tpu_custom_call.1} parent=39 // pred_check
          %p385 = pneg %p172
        $region54: #{tpu_custom_call.1} parent=39 // pred_check_branch
          %387 = sbr.rel (%p385) target = $region56
        $region55: #{tpu_custom_call.1} parent=39 // pred_region
          %388 = dma.done [#allocation9], 576
        $region56: #{tpu_custom_call.1} parent=39 // pred_fallthru
          _
        %s389 = sand.u32 %s57, 1
        %s390 = scalar_lea.sflag [#allocation3], %s389
        %s391 = sand.u32 %s57, 1
        %s392 = smul.addr %s391, 192
        %s393 = scalar_lea.vmem [#allocation2], %s392
        %p394 = pneg %p70
        %p395 = pneg %p67
        %s396 = sand.u32 %s26, 1
        %s397 = scalar_lea.sflag [#allocation6], %s396
        %s398 = sand.u32 %s95, 1
        %s399 = smul.addr %s398, 24
        %s400 = scalar_lea.vmem [#allocation5], %s399
        %p401 = pneg %p108
        %p402 = pneg %p105
        %s403 = sand.u32 %s26, 1
        %s404 = scalar_lea.sflag [#allocation6], %s403
        %s405 = sand.u32 %s133, 1
        %s406 = smul.addr %s405, 24
        %s407 = scalar_lea.vmem [#allocation7], %s406
        %p408 = pneg %p146
        %p409 = pneg %p143
        %p410 = pneg %p172
        %p411 = pneg %p169
        %s412 = smul.u32 3, %s31
        %p413 = scmp.lt.s32.totalorder %s412, 2
        %s414 = scalar_select %p413, %s412, 2
        %s415 = scalar_lea.vmem %s4, %s414
        %p416 = pneg %p198
        %p417 = pneg %p195
        %p418 = pneg %p228
        %p419 = pneg %p225
        %s420 = sand.u32 %s215, 1
        %s421 = scalar_lea.sflag [#allocation4], %s420
        %s422 = sand.u32 %s215, 1
        %s423 = smul.addr %s422, 192
        %s424 = scalar_lea.vmem [#allocation10], %s423
        %s425 = smul.u32 8, %s33
        %s426 = smul.u32 3, %s31
        %s427 = smul.u32 %s33, 8
        %s428 = ssub.s32 %s427, 1
        %p429 = scmp.gt.s32.totalorder %s428, 0
        %s430 = scalar_select %p429, %s428, 0
        %s431 = smul.u32 3, %s31
        %s432 = smul.u32 %s33, 8
        %s433 = sadd.s32 %s432, 8
        %p434 = scmp.lt.s32.totalorder %s433, 7
        %s435 = scalar_select %p434, %s433, 7
        %s436 = smul.u32 3, %s31
        %s437 = smul.u32 3, %s31
        %s438 = smul.u32 3, %s31
        %p439 = scmp.lt.s32.totalorder %s438, 2
        %s440 = scalar_select %p439, %s438, 2
        %s441 = scalar_lea.vmem %s4, %s440
        %s442 = smul.u32 3, %s31
        %s443 = smul.u32 8, %s33
        %s444 = smul.u32 3, %s31
        %v445 = vld [vmem:[%s362] sm:$0xff]
        %v446 = vld [vmem:[%s362 + $0x8] sm:$0xff]
        %v447 = vld [vmem:[%s362 + $0x10] sm:$0xff]
        %v448 = vld [vmem:[%s362 + $0x18] sm:$0xff]
        %v449 = vld [vmem:[%s362 + $0x20] sm:$0xff]
        %v450 = vld [vmem:[%s362 + $0x28] sm:$0xff]
        %v451 = vld [vmem:[%s362 + $0x30] sm:$0xff]
        %v452 = vld [vmem:[%s362 + $0x38] sm:$0xff]
        %v453 = vld [vmem:[%s362 + $0x40] sm:$0xff]
        %v454 = vld [vmem:[%s362 + $0x48] sm:$0xff]
        %v455 = vld [vmem:[%s362 + $0x50] sm:$0xff]
        %v456 = vld [vmem:[%s362 + $0x58] sm:$0xff]
        %v457 = vld [vmem:[%s362 + $0x60] sm:$0xff]
        %v458 = vld [vmem:[%s362 + $0x68] sm:$0xff]
        %v459 = vld [vmem:[%s362 + $0x70] sm:$0xff]
        %v460 = vld [vmem:[%s362 + $0x78] sm:$0xff]
        %v461 = vld [vmem:[%s362 + $0x80] sm:$0xff]
        %v462 = vld [vmem:[%s362 + $0x88] sm:$0xff]
        %v463 = vld [vmem:[%s362 + $0x90] sm:$0xff]
        %v464 = vld [vmem:[%s362 + $0x98] sm:$0xff]
        %v465 = vld [vmem:[%s362 + $0xa0] sm:$0xff]
        %v466 = vld [vmem:[%s362 + $0xa8] sm:$0xff]
        %v467 = vld [vmem:[%s362 + $0xb0] sm:$0xff]
        %v468 = vld [vmem:[%s362 + $0xb8] sm:$0xff]
        %p469 = scmp.gt.s32.totalorder %s33, 0
        %s470 = scalar_select %p469, 1, 0
        %s471 = scvt.s32.f32 %s470
        %p472 = scmp.lt.s32.totalorder %s33, 0
        %s473 = scalar_select %p472, 1, 0
        %s474 = scvt.s32.f32 %s473
        %v475 = vld [vmem:[%s371] sm:$0xff]
        %v476 = vld [vmem:[%s371 + $0x8] sm:$0xff]
        %v477 = vld [vmem:[%s371 + $0x10] sm:$0xff]
        %v478 = vstv %s471
        %v479 = vmul.f32 %v475, %v478
        %v480 = vmul.f32 %v476, %v478
        %v481 = vmul.f32 %v477, %v478
        %v482 = vld [vmem:[%s380] sm:$0xff]
        %v483 = vld [vmem:[%s380 + $0x8] sm:$0xff]
        %v484 = vld [vmem:[%s380 + $0x10] sm:$0xff]
        %v485 = vstv %s474
        %v486 = vmul.f32 %v482, %v485
        %v487 = vmul.f32 %v483, %v485
        %v488 = vmul.f32 %v484, %v485
        %v489 = vrot.slane %v479, 7
        %v490 = vrot.slane %v480, 7
        %v491 = vrot.slane %v481, 7
        %v492 = vrot.slane %v445, 7
        %v493 = vrot.slane %v446, 7
        %v494 = vrot.slane %v447, 7
        %v495 = vrot.slane %v448, 7
        %v496 = vrot.slane %v449, 7
        %v497 = vrot.slane %v450, 7
        %v498 = vrot.slane %v451, 7
        %v499 = vrot.slane %v452, 7
        %v500 = vrot.slane %v453, 7
        %v501 = vrot.slane %v454, 7
        %v502 = vrot.slane %v455, 7
        %v503 = vrot.slane %v456, 7
        %v504 = vrot.slane %v457, 7
        %v505 = vrot.slane %v458, 7
        %v506 = vrot.slane %v459, 7
        %v507 = vrot.slane %v460, 7
        %v508 = vrot.slane %v461, 7
        %v509 = vrot.slane %v462, 7
        %v510 = vrot.slane %v463, 7
        %v511 = vrot.slane %v464, 7
        %v512 = vrot.slane %v465, 7
        %v513 = vrot.slane %v466, 7
        %v514 = vrot.slane %v467, 7
        %v515 = vrot.slane %v468, 7
        %v516 = vrot.slane %v486, 7
        %v517 = vrot.slane %v487, 7
        %v518 = vrot.slane %v488, 7
        %v519 = vrot.slane %v479, 1
        %v520 = vrot.slane %v480, 1
        %v521 = vrot.slane %v481, 1
        %v522 = vrot.slane %v445, 1
        %v523 = vrot.slane %v446, 1
        %v524 = vrot.slane %v447, 1
        %v525 = vrot.slane %v448, 1
        %v526 = vrot.slane %v449, 1
        %v527 = vrot.slane %v450, 1
        %v528 = vrot.slane %v451, 1
        %v529 = vrot.slane %v452, 1
        %v530 = vrot.slane %v453, 1
        %v531 = vrot.slane %v454, 1
        %v532 = vrot.slane %v455, 1
        %v533 = vrot.slane %v456, 1
        %v534 = vrot.slane %v457, 1
        %v535 = vrot.slane %v458, 1
        %v536 = vrot.slane %v459, 1
        %v537 = vrot.slane %v460, 1
        %v538 = vrot.slane %v461, 1
        %v539 = vrot.slane %v462, 1
        %v540 = vrot.slane %v463, 1
        %v541 = vrot.slane %v464, 1
        %v542 = vrot.slane %v465, 1
        %v543 = vrot.slane %v466, 1
        %v544 = vrot.slane %v467, 1
        %v545 = vrot.slane %v468, 1
        %v546 = vrot.slane %v486, 1
        %v547 = vrot.slane %v487, 1
        %v548 = vrot.slane %v488, 1
        %v549 = vld [vmem:[#allocation8] sm:$0x77]
        %v550 = vld [vmem:[#allocation8 + $0x8] sm:$0x7]
        %v551 = vld [vmem:[#allocation8 + $0xc] sm:$0x77]
        %v552 = vld [vmem:[#allocation8 + $0x14] sm:$0x7]
        %v553 = vld [vmem:[#allocation8 + $0x18] sm:$0x77]
        %v554 = vld [vmem:[#allocation8 + $0x20] sm:$0x7]
        %v555 = vlaneseq
        %v556 = vshrl.u32 %v555, 7
        %vm557 = vcmp.ge.s32.totalorder %v556, 1
        %v558 = vsel %vm557, 1, 0
        %v559 = vcvt.s32.f32 %v558
        %vm560 = vcmp.le.s32.totalorder %v556, 6
        %v561 = vsel %vm560, 1, 0
        %v562 = vcvt.s32.f32 %v561
        %v563 = vld [vmem:[%s441] sm:$0x7]
        %v565 = vlaneseq
        %v566 = vshrl.u32 %v565, 7
        %v567 = vsub.s32 0, %v566
        %v568 = vrot.slane %v563, %v567
        %v569 = vlaneseq
        %v570 = vshrl.u32 %v569, 7
        %v571 = vsub.s32 1, %v570
        %v572 = vrot.slane %v563, %v571
        %v573 = vlaneseq
        %v574 = vshrl.u32 %v573, 7
        %v575 = vsub.s32 2, %v574
        %v576 = vrot.slane %v563, %v575
        %v580 = vadd.f32 %v568, 0.0
        %v581 = vadd.f32 %v572, 0.0
        %v582 = vadd.f32 %v576, 0.0
        %v585 = vlaneseq
        %v586 = vshrl.u32 %v585, 7
        %v587 = vsub.s32 1, %v586
        %v588 = vrot.slane %v549, %v587
        %v589 = vlaneseq
        %v590 = vshrl.u32 %v589, 7
        %v591 = vsub.s32 5, %v590
        %v592 = vrot.slane %v549, %v591
        %v593 = vlaneseq
        %v594 = vshrl.u32 %v593, 7
        %v595 = vsub.s32 1, %v594
        %v596 = vrot.slane %v550, %v595
        %v600 = vlaneseq
        %v601 = vshrl.u32 %v600, 7
        %v602 = vsub.s32 1, %v601
        %v603 = vrot.slane %v588, %v602
        %v604 = vlaneseq
        %v605 = vshrl.u32 %v604, 7
        %v606 = vsub.s32 1, %v605
        %v607 = vrot.slane %v592, %v606
        %v608 = vlaneseq
        %v609 = vshrl.u32 %v608, 7
        %v610 = vsub.s32 1, %v609
        %v611 = vrot.slane %v596, %v610
        %v612 = vmul.f32 %v479, %v603
        %v613 = vmul.f32 %v480, %v607
        %v614 = vmul.f32 %v481, %v611
        %v615 = vmul.f32 %v445, %v603
        %v616 = vmul.f32 %v446, %v607
        %v617 = vmul.f32 %v447, %v611
        %v618 = vmul.f32 %v448, %v603
        %v619 = vmul.f32 %v449, %v607
        %v620 = vmul.f32 %v450, %v611
        %v621 = vmul.f32 %v451, %v603
        %v622 = vmul.f32 %v452, %v607
        %v623 = vmul.f32 %v453, %v611
        %v624 = vmul.f32 %v454, %v603
        %v625 = vmul.f32 %v455, %v607
        %v626 = vmul.f32 %v456, %v611
        %v627 = vmul.f32 %v457, %v603
        %v628 = vmul.f32 %v458, %v607
        %v629 = vmul.f32 %v459, %v611
        %v630 = vmul.f32 %v460, %v603
        %v631 = vmul.f32 %v461, %v607
        %v632 = vmul.f32 %v462, %v611
        %v633 = vmul.f32 %v463, %v603
        %v634 = vmul.f32 %v464, %v607
        %v635 = vmul.f32 %v465, %v611
        %v636 = vadd.f32 %v580, %v612
        %v637 = vadd.f32 %v581, %v613
        %v638 = vadd.f32 %v582, %v614
        %v639 = vadd.f32 %v580, %v615
        %v640 = vadd.f32 %v581, %v616
        %v641 = vadd.f32 %v582, %v617
        %v642 = vadd.f32 %v580, %v618
        %v643 = vadd.f32 %v581, %v619
        %v644 = vadd.f32 %v582, %v620
        %v645 = vadd.f32 %v580, %v621
        %v646 = vadd.f32 %v581, %v622
        %v647 = vadd.f32 %v582, %v623
        %v648 = vadd.f32 %v580, %v624
        %v649 = vadd.f32 %v581, %v625
        %v650 = vadd.f32 %v582, %v626
        %v651 = vadd.f32 %v580, %v627
        %v652 = vadd.f32 %v581, %v628
        %v653 = vadd.f32 %v582, %v629
        %v654 = vadd.f32 %v580, %v630
        %v655 = vadd.f32 %v581, %v631
        %v656 = vadd.f32 %v582, %v632
        %v657 = vadd.f32 %v580, %v633
        %v658 = vadd.f32 %v581, %v634
        %v659 = vadd.f32 %v582, %v635
        %v660 = vlaneseq
        %v661 = vshrl.u32 %v660, 7
        %v662 = vsub.s32 0, %v661
        %v663 = vrot.slane %v549, %v662
        %v664 = vlaneseq
        %v665 = vshrl.u32 %v664, 7
        %v666 = vsub.s32 4, %v665
        %v667 = vrot.slane %v549, %v666
        %v668 = vlaneseq
        %v669 = vshrl.u32 %v668, 7
        %v670 = vsub.s32 0, %v669
        %v671 = vrot.slane %v550, %v670
        %v675 = vlaneseq
        %v676 = vshrl.u32 %v675, 7
        %v677 = vsub.s32 0, %v676
        %v678 = vrot.slane %v663, %v677
        %v679 = vlaneseq
        %v680 = vshrl.u32 %v679, 7
        %v681 = vsub.s32 0, %v680
        %v682 = vrot.slane %v667, %v681
        %v683 = vlaneseq
        %v684 = vshrl.u32 %v683, 7
        %v685 = vsub.s32 0, %v684
        %v686 = vrot.slane %v671, %v685
        %v687 = vmul.f32 %v559, %v678
        %v688 = vmul.f32 %v559, %v682
        %v689 = vmul.f32 %v559, %v686
        %v690 = vmul.f32 %v489, %v687
        %v691 = vmul.f32 %v490, %v688
        %v692 = vmul.f32 %v491, %v689
        %v693 = vmul.f32 %v492, %v687
        %v694 = vmul.f32 %v493, %v688
        %v695 = vmul.f32 %v494, %v689
        %v696 = vmul.f32 %v495, %v687
        %v697 = vmul.f32 %v496, %v688
        %v698 = vmul.f32 %v497, %v689
        %v699 = vmul.f32 %v498, %v687
        %v700 = vmul.f32 %v499, %v688
        %v701 = vmul.f32 %v500, %v689
        %v702 = vmul.f32 %v501, %v687
        %v703 = vmul.f32 %v502, %v688
        %v704 = vmul.f32 %v503, %v689
        %v705 = vmul.f32 %v504, %v687
        %v706 = vmul.f32 %v505, %v688
        %v707 = vmul.f32 %v506, %v689
        %v708 = vmul.f32 %v507, %v687
        %v709 = vmul.f32 %v508, %v688
        %v710 = vmul.f32 %v509, %v689
        %v711 = vmul.f32 %v510, %v687
        %v712 = vmul.f32 %v511, %v688
        %v713 = vmul.f32 %v512, %v689
        %v714 = vadd.f32 %v636, %v690
        %v715 = vadd.f32 %v637, %v691
        %v716 = vadd.f32 %v638, %v692
        %v717 = vadd.f32 %v639, %v693
        %v718 = vadd.f32 %v640, %v694
        %v719 = vadd.f32 %v641, %v695
        %v720 = vadd.f32 %v642, %v696
        %v721 = vadd.f32 %v643, %v697
        %v722 = vadd.f32 %v644, %v698
        %v723 = vadd.f32 %v645, %v699
        %v724 = vadd.f32 %v646, %v700
        %v725 = vadd.f32 %v647, %v701
        %v726 = vadd.f32 %v648, %v702
        %v727 = vadd.f32 %v649, %v703
        %v728 = vadd.f32 %v650, %v704
        %v729 = vadd.f32 %v651, %v705
        %v730 = vadd.f32 %v652, %v706
        %v731 = vadd.f32 %v653, %v707
        %v732 = vadd.f32 %v654, %v708
        %v733 = vadd.f32 %v655, %v709
        %v734 = vadd.f32 %v656, %v710
        %v735 = vadd.f32 %v657, %v711
        %v736 = vadd.f32 %v658, %v712
        %v737 = vadd.f32 %v659, %v713
        %v738 = vlaneseq
        %v739 = vshrl.u32 %v738, 7
        %v740 = vsub.s32 2, %v739
        %v741 = vrot.slane %v549, %v740
        %v742 = vlaneseq
        %v743 = vshrl.u32 %v742, 7
        %v744 = vsub.s32 6, %v743
        %v745 = vrot.slane %v549, %v744
        %v746 = vlaneseq
        %v747 = vshrl.u32 %v746, 7
        %v748 = vsub.s32 2, %v747
        %v749 = vrot.slane %v550, %v748
        %v753 = vlaneseq
        %v754 = vshrl.u32 %v753, 7
        %v755 = vsub.s32 2, %v754
        %v756 = vrot.slane %v741, %v755
        %v757 = vlaneseq
        %v758 = vshrl.u32 %v757, 7
        %v759 = vsub.s32 2, %v758
        %v760 = vrot.slane %v745, %v759
        %v761 = vlaneseq
        %v762 = vshrl.u32 %v761, 7
        %v763 = vsub.s32 2, %v762
        %v764 = vrot.slane %v749, %v763
        %v765 = vmul.f32 %v562, %v756
        %v766 = vmul.f32 %v562, %v760
        %v767 = vmul.f32 %v562, %v764
        %v768 = vmul.f32 %v519, %v765
        %v769 = vmul.f32 %v520, %v766
        %v770 = vmul.f32 %v521, %v767
        %v771 = vmul.f32 %v522, %v765
        %v772 = vmul.f32 %v523, %v766
        %v773 = vmul.f32 %v524, %v767
        %v774 = vmul.f32 %v525, %v765
        %v775 = vmul.f32 %v526, %v766
        %v776 = vmul.f32 %v527, %v767
        %v777 = vmul.f32 %v528, %v765
        %v778 = vmul.f32 %v529, %v766
        %v779 = vmul.f32 %v530, %v767
        %v780 = vmul.f32 %v531, %v765
        %v781 = vmul.f32 %v532, %v766
        %v782 = vmul.f32 %v533, %v767
        %v783 = vmul.f32 %v534, %v765
        %v784 = vmul.f32 %v535, %v766
        %v785 = vmul.f32 %v536, %v767
        %v786 = vmul.f32 %v537, %v765
        %v787 = vmul.f32 %v538, %v766
        %v788 = vmul.f32 %v539, %v767
        %v789 = vmul.f32 %v540, %v765
        %v790 = vmul.f32 %v541, %v766
        %v791 = vmul.f32 %v542, %v767
        %v792 = vadd.f32 %v714, %v768
        %v793 = vadd.f32 %v715, %v769
        %v794 = vadd.f32 %v716, %v770
        %v795 = vadd.f32 %v717, %v771
        %v796 = vadd.f32 %v718, %v772
        %v797 = vadd.f32 %v719, %v773
        %v798 = vadd.f32 %v720, %v774
        %v799 = vadd.f32 %v721, %v775
        %v800 = vadd.f32 %v722, %v776
        %v801 = vadd.f32 %v723, %v777
        %v802 = vadd.f32 %v724, %v778
        %v803 = vadd.f32 %v725, %v779
        %v804 = vadd.f32 %v726, %v780
        %v805 = vadd.f32 %v727, %v781
        %v806 = vadd.f32 %v728, %v782
        %v807 = vadd.f32 %v729, %v783
        %v808 = vadd.f32 %v730, %v784
        %v809 = vadd.f32 %v731, %v785
        %v810 = vadd.f32 %v732, %v786
        %v811 = vadd.f32 %v733, %v787
        %v812 = vadd.f32 %v734, %v788
        %v813 = vadd.f32 %v735, %v789
        %v814 = vadd.f32 %v736, %v790
        %v815 = vadd.f32 %v737, %v791
        %v818 = vlaneseq
        %v819 = vshrl.u32 %v818, 7
        %v820 = vsub.s32 1, %v819
        %v821 = vrot.slane %v551, %v820
        %v822 = vlaneseq
        %v823 = vshrl.u32 %v822, 7
        %v824 = vsub.s32 5, %v823
        %v825 = vrot.slane %v551, %v824
        %v826 = vlaneseq
        %v827 = vshrl.u32 %v826, 7
        %v828 = vsub.s32 1, %v827
        %v829 = vrot.slane %v552, %v828
        %v833 = vlaneseq
        %v834 = vshrl.u32 %v833, 7
        %v835 = vsub.s32 1, %v834
        %v836 = vrot.slane %v821, %v835
        %v837 = vlaneseq
        %v838 = vshrl.u32 %v837, 7
        %v839 = vsub.s32 1, %v838
        %v840 = vrot.slane %v825, %v839
        %v841 = vlaneseq
        %v842 = vshrl.u32 %v841, 7
        %v843 = vsub.s32 1, %v842
        %v844 = vrot.slane %v829, %v843
        %v845 = vmul.f32 %v445, %v836
        %v846 = vmul.f32 %v446, %v840
        %v847 = vmul.f32 %v447, %v844
        %v848 = vmul.f32 %v448, %v836
        %v849 = vmul.f32 %v449, %v840
        %v850 = vmul.f32 %v450, %v844
        %v851 = vmul.f32 %v451, %v836
        %v852 = vmul.f32 %v452, %v840
        %v853 = vmul.f32 %v453, %v844
        %v854 = vmul.f32 %v454, %v836
        %v855 = vmul.f32 %v455, %v840
        %v856 = vmul.f32 %v456, %v844
        %v857 = vmul.f32 %v457, %v836
        %v858 = vmul.f32 %v458, %v840
        %v859 = vmul.f32 %v459, %v844
        %v860 = vmul.f32 %v460, %v836
        %v861 = vmul.f32 %v461, %v840
        %v862 = vmul.f32 %v462, %v844
        %v863 = vmul.f32 %v463, %v836
        %v864 = vmul.f32 %v464, %v840
        %v865 = vmul.f32 %v465, %v844
        %v866 = vmul.f32 %v466, %v836
        %v867 = vmul.f32 %v467, %v840
        %v868 = vmul.f32 %v468, %v844
        %v869 = vadd.f32 %v792, %v845
        %v870 = vadd.f32 %v793, %v846
        %v871 = vadd.f32 %v794, %v847
        %v872 = vadd.f32 %v795, %v848
        %v873 = vadd.f32 %v796, %v849
        %v874 = vadd.f32 %v797, %v850
        %v875 = vadd.f32 %v798, %v851
        %v876 = vadd.f32 %v799, %v852
        %v877 = vadd.f32 %v800, %v853
        %v878 = vadd.f32 %v801, %v854
        %v879 = vadd.f32 %v802, %v855
        %v880 = vadd.f32 %v803, %v856
        %v881 = vadd.f32 %v804, %v857
        %v882 = vadd.f32 %v805, %v858
        %v883 = vadd.f32 %v806, %v859
        %v884 = vadd.f32 %v807, %v860
        %v885 = vadd.f32 %v808, %v861
        %v886 = vadd.f32 %v809, %v862
        %v887 = vadd.f32 %v810, %v863
        %v888 = vadd.f32 %v811, %v864
        %v889 = vadd.f32 %v812, %v865
        %v890 = vadd.f32 %v813, %v866
        %v891 = vadd.f32 %v814, %v867
        %v892 = vadd.f32 %v815, %v868
        %v893 = vlaneseq
        %v894 = vshrl.u32 %v893, 7
        %v895 = vsub.s32 0, %v894
        %v896 = vrot.slane %v551, %v895
        %v897 = vlaneseq
        %v898 = vshrl.u32 %v897, 7
        %v899 = vsub.s32 4, %v898
        %v900 = vrot.slane %v551, %v899
        %v901 = vlaneseq
        %v902 = vshrl.u32 %v901, 7
        %v903 = vsub.s32 0, %v902
        %v904 = vrot.slane %v552, %v903
        %v908 = vlaneseq
        %v909 = vshrl.u32 %v908, 7
        %v910 = vsub.s32 0, %v909
        %v911 = vrot.slane %v896, %v910
        %v912 = vlaneseq
        %v913 = vshrl.u32 %v912, 7
        %v914 = vsub.s32 0, %v913
        %v915 = vrot.slane %v900, %v914
        %v916 = vlaneseq
        %v917 = vshrl.u32 %v916, 7
        %v918 = vsub.s32 0, %v917
        %v919 = vrot.slane %v904, %v918
        %v920 = vmul.f32 %v559, %v911
        %v921 = vmul.f32 %v559, %v915
        %v922 = vmul.f32 %v559, %v919
        %v923 = vmul.f32 %v492, %v920
        %v924 = vmul.f32 %v493, %v921
        %v925 = vmul.f32 %v494, %v922
        %v926 = vmul.f32 %v495, %v920
        %v927 = vmul.f32 %v496, %v921
        %v928 = vmul.f32 %v497, %v922
        %v929 = vmul.f32 %v498, %v920
        %v930 = vmul.f32 %v499, %v921
        %v931 = vmul.f32 %v500, %v922
        %v932 = vmul.f32 %v501, %v920
        %v933 = vmul.f32 %v502, %v921
        %v934 = vmul.f32 %v503, %v922
        %v935 = vmul.f32 %v504, %v920
        %v936 = vmul.f32 %v505, %v921
        %v937 = vmul.f32 %v506, %v922
        %v938 = vmul.f32 %v507, %v920
        %v939 = vmul.f32 %v508, %v921
        %v940 = vmul.f32 %v509, %v922
        %v941 = vmul.f32 %v510, %v920
        %v942 = vmul.f32 %v511, %v921
        %v943 = vmul.f32 %v512, %v922
        %v944 = vmul.f32 %v513, %v920
        %v945 = vmul.f32 %v514, %v921
        %v946 = vmul.f32 %v515, %v922
        %v947 = vadd.f32 %v869, %v923
        %v948 = vadd.f32 %v870, %v924
        %v949 = vadd.f32 %v871, %v925
        %v950 = vadd.f32 %v872, %v926
        %v951 = vadd.f32 %v873, %v927
        %v952 = vadd.f32 %v874, %v928
        %v953 = vadd.f32 %v875, %v929
        %v954 = vadd.f32 %v876, %v930
        %v955 = vadd.f32 %v877, %v931
        %v956 = vadd.f32 %v878, %v932
        %v957 = vadd.f32 %v879, %v933
        %v958 = vadd.f32 %v880, %v934
        %v959 = vadd.f32 %v881, %v935
        %v960 = vadd.f32 %v882, %v936
        %v961 = vadd.f32 %v883, %v937
        %v962 = vadd.f32 %v884, %v938
        %v963 = vadd.f32 %v885, %v939
        %v964 = vadd.f32 %v886, %v940
        %v965 = vadd.f32 %v887, %v941
        %v966 = vadd.f32 %v888, %v942
        %v967 = vadd.f32 %v889, %v943
        %v968 = vadd.f32 %v890, %v944
        %v969 = vadd.f32 %v891, %v945
        %v970 = vadd.f32 %v892, %v946
        %v971 = vlaneseq
        %v972 = vshrl.u32 %v971, 7
        %v973 = vsub.s32 2, %v972
        %v974 = vrot.slane %v551, %v973
        %v975 = vlaneseq
        %v976 = vshrl.u32 %v975, 7
        %v977 = vsub.s32 6, %v976
        %v978 = vrot.slane %v551, %v977
        %v979 = vlaneseq
        %v980 = vshrl.u32 %v979, 7
        %v981 = vsub.s32 2, %v980
        %v982 = vrot.slane %v552, %v981
        %v986 = vlaneseq
        %v987 = vshrl.u32 %v986, 7
        %v988 = vsub.s32 2, %v987
        %v989 = vrot.slane %v974, %v988
        %v990 = vlaneseq
        %v991 = vshrl.u32 %v990, 7
        %v992 = vsub.s32 2, %v991
        %v993 = vrot.slane %v978, %v992
        %v994 = vlaneseq
        %v995 = vshrl.u32 %v994, 7
        %v996 = vsub.s32 2, %v995
        %v997 = vrot.slane %v982, %v996
        %v998 = vmul.f32 %v562, %v989
        %v999 = vmul.f32 %v562, %v993
        %v1000 = vmul.f32 %v562, %v997
        %v1001 = vmul.f32 %v522, %v998
        %v1002 = vmul.f32 %v523, %v999
        %v1003 = vmul.f32 %v524, %v1000
        %v1004 = vmul.f32 %v525, %v998
        %v1005 = vmul.f32 %v526, %v999
        %v1006 = vmul.f32 %v527, %v1000
        %v1007 = vmul.f32 %v528, %v998
        %v1008 = vmul.f32 %v529, %v999
        %v1009 = vmul.f32 %v530, %v1000
        %v1010 = vmul.f32 %v531, %v998
        %v1011 = vmul.f32 %v532, %v999
        %v1012 = vmul.f32 %v533, %v1000
        %v1013 = vmul.f32 %v534, %v998
        %v1014 = vmul.f32 %v535, %v999
        %v1015 = vmul.f32 %v536, %v1000
        %v1016 = vmul.f32 %v537, %v998
        %v1017 = vmul.f32 %v538, %v999
        %v1018 = vmul.f32 %v539, %v1000
        %v1019 = vmul.f32 %v540, %v998
        %v1020 = vmul.f32 %v541, %v999
        %v1021 = vmul.f32 %v542, %v1000
        %v1022 = vmul.f32 %v543, %v998
        %v1023 = vmul.f32 %v544, %v999
        %v1024 = vmul.f32 %v545, %v1000
        %v1025 = vadd.f32 %v947, %v1001
        %v1026 = vadd.f32 %v948, %v1002
        %v1027 = vadd.f32 %v949, %v1003
        %v1028 = vadd.f32 %v950, %v1004
        %v1029 = vadd.f32 %v951, %v1005
        %v1030 = vadd.f32 %v952, %v1006
        %v1031 = vadd.f32 %v953, %v1007
        %v1032 = vadd.f32 %v954, %v1008
        %v1033 = vadd.f32 %v955, %v1009
        %v1034 = vadd.f32 %v956, %v1010
        %v1035 = vadd.f32 %v957, %v1011
        %v1036 = vadd.f32 %v958, %v1012
        %v1037 = vadd.f32 %v959, %v1013
        %v1038 = vadd.f32 %v960, %v1014
        %v1039 = vadd.f32 %v961, %v1015
        %v1040 = vadd.f32 %v962, %v1016
        %v1041 = vadd.f32 %v963, %v1017
        %v1042 = vadd.f32 %v964, %v1018
        %v1043 = vadd.f32 %v965, %v1019
        %v1044 = vadd.f32 %v966, %v1020
        %v1045 = vadd.f32 %v967, %v1021
        %v1046 = vadd.f32 %v968, %v1022
        %v1047 = vadd.f32 %v969, %v1023
        %v1048 = vadd.f32 %v970, %v1024
        %v1051 = vlaneseq
        %v1052 = vshrl.u32 %v1051, 7
        %v1053 = vsub.s32 1, %v1052
        %v1054 = vrot.slane %v553, %v1053
        %v1055 = vlaneseq
        %v1056 = vshrl.u32 %v1055, 7
        %v1057 = vsub.s32 5, %v1056
        %v1058 = vrot.slane %v553, %v1057
        %v1059 = vlaneseq
        %v1060 = vshrl.u32 %v1059, 7
        %v1061 = vsub.s32 1, %v1060
        %v1062 = vrot.slane %v554, %v1061
        %v1066 = vlaneseq
        %v1067 = vshrl.u32 %v1066, 7
        %v1068 = vsub.s32 1, %v1067
        %v1069 = vrot.slane %v1054, %v1068
        %v1070 = vlaneseq
        %v1071 = vshrl.u32 %v1070, 7
        %v1072 = vsub.s32 1, %v1071
        %v1073 = vrot.slane %v1058, %v1072
        %v1074 = vlaneseq
        %v1075 = vshrl.u32 %v1074, 7
        %v1076 = vsub.s32 1, %v1075
        %v1077 = vrot.slane %v1062, %v1076
        %v1078 = vmul.f32 %v448, %v1069
        %v1079 = vmul.f32 %v449, %v1073
        %v1080 = vmul.f32 %v450, %v1077
        %v1081 = vmul.f32 %v451, %v1069
        %v1082 = vmul.f32 %v452, %v1073
        %v1083 = vmul.f32 %v453, %v1077
        %v1084 = vmul.f32 %v454, %v1069
        %v1085 = vmul.f32 %v455, %v1073
        %v1086 = vmul.f32 %v456, %v1077
        %v1087 = vmul.f32 %v457, %v1069
        %v1088 = vmul.f32 %v458, %v1073
        %v1089 = vmul.f32 %v459, %v1077
        %v1090 = vmul.f32 %v460, %v1069
        %v1091 = vmul.f32 %v461, %v1073
        %v1092 = vmul.f32 %v462, %v1077
        %v1093 = vmul.f32 %v463, %v1069
        %v1094 = vmul.f32 %v464, %v1073
        %v1095 = vmul.f32 %v465, %v1077
        %v1096 = vmul.f32 %v466, %v1069
        %v1097 = vmul.f32 %v467, %v1073
        %v1098 = vmul.f32 %v468, %v1077
        %v1099 = vmul.f32 %v486, %v1069
        %v1100 = vmul.f32 %v487, %v1073
        %v1101 = vmul.f32 %v488, %v1077
        %v1102 = vadd.f32 %v1025, %v1078
        %v1103 = vadd.f32 %v1026, %v1079
        %v1104 = vadd.f32 %v1027, %v1080
        %v1105 = vadd.f32 %v1028, %v1081
        %v1106 = vadd.f32 %v1029, %v1082
        %v1107 = vadd.f32 %v1030, %v1083
        %v1108 = vadd.f32 %v1031, %v1084
        %v1109 = vadd.f32 %v1032, %v1085
        %v1110 = vadd.f32 %v1033, %v1086
        %v1111 = vadd.f32 %v1034, %v1087
        %v1112 = vadd.f32 %v1035, %v1088
        %v1113 = vadd.f32 %v1036, %v1089
        %v1114 = vadd.f32 %v1037, %v1090
        %v1115 = vadd.f32 %v1038, %v1091
        %v1116 = vadd.f32 %v1039, %v1092
        %v1117 = vadd.f32 %v1040, %v1093
        %v1118 = vadd.f32 %v1041, %v1094
        %v1119 = vadd.f32 %v1042, %v1095
        %v1120 = vadd.f32 %v1043, %v1096
        %v1121 = vadd.f32 %v1044, %v1097
        %v1122 = vadd.f32 %v1045, %v1098
        %v1123 = vadd.f32 %v1046, %v1099
        %v1124 = vadd.f32 %v1047, %v1100
        %v1125 = vadd.f32 %v1048, %v1101
        %v1126 = vlaneseq
        %v1127 = vshrl.u32 %v1126, 7
        %v1128 = vsub.s32 0, %v1127
        %v1129 = vrot.slane %v553, %v1128
        %v1130 = vlaneseq
        %v1131 = vshrl.u32 %v1130, 7
        %v1132 = vsub.s32 4, %v1131
        %v1133 = vrot.slane %v553, %v1132
        %v1134 = vlaneseq
        %v1135 = vshrl.u32 %v1134, 7
        %v1136 = vsub.s32 0, %v1135
        %v1137 = vrot.slane %v554, %v1136
        %v1141 = vlaneseq
        %v1142 = vshrl.u32 %v1141, 7
        %v1143 = vsub.s32 0, %v1142
        %v1144 = vrot.slane %v1129, %v1143
        %v1145 = vlaneseq
        %v1146 = vshrl.u32 %v1145, 7
        %v1147 = vsub.s32 0, %v1146
        %v1148 = vrot.slane %v1133, %v1147
        %v1149 = vlaneseq
        %v1150 = vshrl.u32 %v1149, 7
        %v1151 = vsub.s32 0, %v1150
        %v1152 = vrot.slane %v1137, %v1151
        %v1153 = vmul.f32 %v559, %v1144
        %v1154 = vmul.f32 %v559, %v1148
        %v1155 = vmul.f32 %v559, %v1152
        %v1156 = vmul.f32 %v495, %v1153
        %v1157 = vmul.f32 %v496, %v1154
        %v1158 = vmul.f32 %v497, %v1155
        %v1159 = vmul.f32 %v498, %v1153
        %v1160 = vmul.f32 %v499, %v1154
        %v1161 = vmul.f32 %v500, %v1155
        %v1162 = vmul.f32 %v501, %v1153
        %v1163 = vmul.f32 %v502, %v1154
        %v1164 = vmul.f32 %v503, %v1155
        %v1165 = vmul.f32 %v504, %v1153
        %v1166 = vmul.f32 %v505, %v1154
        %v1167 = vmul.f32 %v506, %v1155
        %v1168 = vmul.f32 %v507, %v1153
        %v1169 = vmul.f32 %v508, %v1154
        %v1170 = vmul.f32 %v509, %v1155
        %v1171 = vmul.f32 %v510, %v1153
        %v1172 = vmul.f32 %v511, %v1154
        %v1173 = vmul.f32 %v512, %v1155
        %v1174 = vmul.f32 %v513, %v1153
        %v1175 = vmul.f32 %v514, %v1154
        %v1176 = vmul.f32 %v515, %v1155
        %v1177 = vmul.f32 %v516, %v1153
        %v1178 = vmul.f32 %v517, %v1154
        %v1179 = vmul.f32 %v518, %v1155
        %v1180 = vadd.f32 %v1102, %v1156
        %v1181 = vadd.f32 %v1103, %v1157
        %v1182 = vadd.f32 %v1104, %v1158
        %v1183 = vadd.f32 %v1105, %v1159
        %v1184 = vadd.f32 %v1106, %v1160
        %v1185 = vadd.f32 %v1107, %v1161
        %v1186 = vadd.f32 %v1108, %v1162
        %v1187 = vadd.f32 %v1109, %v1163
        %v1188 = vadd.f32 %v1110, %v1164
        %v1189 = vadd.f32 %v1111, %v1165
        %v1190 = vadd.f32 %v1112, %v1166
        %v1191 = vadd.f32 %v1113, %v1167
        %v1192 = vadd.f32 %v1114, %v1168
        %v1193 = vadd.f32 %v1115, %v1169
        %v1194 = vadd.f32 %v1116, %v1170
        %v1195 = vadd.f32 %v1117, %v1171
        %v1196 = vadd.f32 %v1118, %v1172
        %v1197 = vadd.f32 %v1119, %v1173
        %v1198 = vadd.f32 %v1120, %v1174
        %v1199 = vadd.f32 %v1121, %v1175
        %v1200 = vadd.f32 %v1122, %v1176
        %v1201 = vadd.f32 %v1123, %v1177
        %v1202 = vadd.f32 %v1124, %v1178
        %v1203 = vadd.f32 %v1125, %v1179
        %v1204 = vlaneseq
        %v1205 = vshrl.u32 %v1204, 7
        %v1206 = vsub.s32 2, %v1205
        %v1207 = vrot.slane %v553, %v1206
        %v1208 = vlaneseq
        %v1209 = vshrl.u32 %v1208, 7
        %v1210 = vsub.s32 6, %v1209
        %v1211 = vrot.slane %v553, %v1210
        %v1212 = vlaneseq
        %v1213 = vshrl.u32 %v1212, 7
        %v1214 = vsub.s32 2, %v1213
        %v1215 = vrot.slane %v554, %v1214
        %v1219 = vlaneseq
        %v1220 = vshrl.u32 %v1219, 7
        %v1221 = vsub.s32 2, %v1220
        %v1222 = vrot.slane %v1207, %v1221
        %v1223 = vlaneseq
        %v1224 = vshrl.u32 %v1223, 7
        %v1225 = vsub.s32 2, %v1224
        %v1226 = vrot.slane %v1211, %v1225
        %v1227 = vlaneseq
        %v1228 = vshrl.u32 %v1227, 7
        %v1229 = vsub.s32 2, %v1228
        %v1230 = vrot.slane %v1215, %v1229
        %v1231 = vmul.f32 %v562, %v1222
        %v1232 = vmul.f32 %v562, %v1226
        %v1233 = vmul.f32 %v562, %v1230
        %v1234 = vmul.f32 %v525, %v1231
        %v1235 = vmul.f32 %v526, %v1232
        %v1236 = vmul.f32 %v527, %v1233
        %v1237 = vmul.f32 %v528, %v1231
        %v1238 = vmul.f32 %v529, %v1232
        %v1239 = vmul.f32 %v530, %v1233
        %v1240 = vmul.f32 %v531, %v1231
        %v1241 = vmul.f32 %v532, %v1232
        %v1242 = vmul.f32 %v533, %v1233
        %v1243 = vmul.f32 %v534, %v1231
        %v1244 = vmul.f32 %v535, %v1232
        %v1245 = vmul.f32 %v536, %v1233
        %v1246 = vmul.f32 %v537, %v1231
        %v1247 = vmul.f32 %v538, %v1232
        %v1248 = vmul.f32 %v539, %v1233
        %v1249 = vmul.f32 %v540, %v1231
        %v1250 = vmul.f32 %v541, %v1232
        %v1251 = vmul.f32 %v542, %v1233
        %v1252 = vmul.f32 %v543, %v1231
        %v1253 = vmul.f32 %v544, %v1232
        %v1254 = vmul.f32 %v545, %v1233
        %v1255 = vmul.f32 %v546, %v1231
        %v1256 = vmul.f32 %v547, %v1232
        %v1257 = vmul.f32 %v548, %v1233
        %v1258 = vadd.f32 %v1180, %v1234
        %v1259 = vadd.f32 %v1181, %v1235
        %v1260 = vadd.f32 %v1182, %v1236
        %v1261 = vadd.f32 %v1183, %v1237
        %v1262 = vadd.f32 %v1184, %v1238
        %v1263 = vadd.f32 %v1185, %v1239
        %v1264 = vadd.f32 %v1186, %v1240
        %v1265 = vadd.f32 %v1187, %v1241
        %v1266 = vadd.f32 %v1188, %v1242
        %v1267 = vadd.f32 %v1189, %v1243
        %v1268 = vadd.f32 %v1190, %v1244
        %v1269 = vadd.f32 %v1191, %v1245
        %v1270 = vadd.f32 %v1192, %v1246
        %v1271 = vadd.f32 %v1193, %v1247
        %v1272 = vadd.f32 %v1194, %v1248
        %v1273 = vadd.f32 %v1195, %v1249
        %v1274 = vadd.f32 %v1196, %v1250
        %v1275 = vadd.f32 %v1197, %v1251
        %v1276 = vadd.f32 %v1198, %v1252
        %v1277 = vadd.f32 %v1199, %v1253
        %v1278 = vadd.f32 %v1200, %v1254
        %v1279 = vadd.f32 %v1201, %v1255
        %v1280 = vadd.f32 %v1202, %v1256
        %v1281 = vadd.f32 %v1203, %v1257
        %1282 = vst [vmem:[%s424] sm:$0xff] %v1258
        %1283 = vst [vmem:[%s424 + $0x8] sm:$0xff] %v1259
        %1284 = vst [vmem:[%s424 + $0x10] sm:$0xff] %v1260
        %1285 = vst [vmem:[%s424 + $0x18] sm:$0xff] %v1261
        %1286 = vst [vmem:[%s424 + $0x20] sm:$0xff] %v1262
        %1287 = vst [vmem:[%s424 + $0x28] sm:$0xff] %v1263
        %1288 = vst [vmem:[%s424 + $0x30] sm:$0xff] %v1264
        %1289 = vst [vmem:[%s424 + $0x38] sm:$0xff] %v1265
        %1290 = vst [vmem:[%s424 + $0x40] sm:$0xff] %v1266
        %1291 = vst [vmem:[%s424 + $0x48] sm:$0xff] %v1267
        %1292 = vst [vmem:[%s424 + $0x50] sm:$0xff] %v1268
        %1293 = vst [vmem:[%s424 + $0x58] sm:$0xff] %v1269
        %1294 = vst [vmem:[%s424 + $0x60] sm:$0xff] %v1270
        %1295 = vst [vmem:[%s424 + $0x68] sm:$0xff] %v1271
        %1296 = vst [vmem:[%s424 + $0x70] sm:$0xff] %v1272
        %1297 = vst [vmem:[%s424 + $0x78] sm:$0xff] %v1273
        %1298 = vst [vmem:[%s424 + $0x80] sm:$0xff] %v1274
        %1299 = vst [vmem:[%s424 + $0x88] sm:$0xff] %v1275
        %1300 = vst [vmem:[%s424 + $0x90] sm:$0xff] %v1276
        %1301 = vst [vmem:[%s424 + $0x98] sm:$0xff] %v1277
        %1302 = vst [vmem:[%s424 + $0xa0] sm:$0xff] %v1278
        %1303 = vst [vmem:[%s424 + $0xa8] sm:$0xff] %v1279
        %1304 = vst [vmem:[%s424 + $0xb0] sm:$0xff] %v1280
        %1305 = vst [vmem:[%s424 + $0xb8] sm:$0xff] %v1281
        %s1306 = sand.u32 %s215, 1
        %s1307 = scalar_lea.sflag [#allocation4], %s1306
        %s1308 = sand.u32 %s215, 1
        %s1309 = smul.addr %s1308, 192
        %s1310 = scalar_lea.vmem [#allocation10], %s1309
        // Predicated region
        $region57: #{tpu_custom_call.1} parent=39 // pred_check
          %p1311 = pneg %p225
        $region58: #{tpu_custom_call.1} parent=39 // pred_check_branch
          %1313 = sbr.rel (%p1311) target = $region60
        $region59: #{tpu_custom_call.1} parent=39 // pred_region
          %s1314 = smul.u32 8, %s33
          %s1315 = smul.u32 3, %s31
          %s1317 = ssub.s32 3072, 3072
          %1318 = vsyncadd %s1307, %s1317
          %s1319 = smul.addr %s1314, 3
          %s1320 = sadd.s32 %s1315, %s1319
          %s1321 = smul.addr %s32, 24
          %s1322 = sadd.s32 %s1320, %s1321
          %s1323 = smul.addr %s1322, 128
          %s1324 = scalar_lea.hbm %s5, %s1323
          %s1325 = sshll.u32 %s1310, 4
          %s1326 = int_to_ptr.vmem [resolvable:$true] %s1325
          %1331 = dma.vmem_to_hbm [thread:$0]  %s1326, 3072, %s1324, %s1307, 384, 384, 24
        $region60: #{tpu_custom_call.1} parent=39 // pred_fallthru
          _
      $region40: #{tpu_custom_call.1} parent=5 // pred_fallthru
        _
      %p1332 = scmp.le.s32.totalorder 2, %s21
      // Predicated region
      $region61: #{tpu_custom_call.1} parent=5 // pred_check
        %p1333 = pneg %p1332
      $region62: #{tpu_custom_call.1} parent=5 // pred_check_branch
        %1335 = sbr.rel (%p1333) target = $region64
      $region63: #{tpu_custom_call.1} parent=5 // pred_region
        %s1336 = ssub.s32 %s21, 2
        // Predicated region
        $region65: #{tpu_custom_call.1} parent=63 // pred_check
          %p1337 = pneg %p231
        $region66: #{tpu_custom_call.1} parent=63 // pred_check_branch
          %1339 = sbr.rel (%p1337) target = $region68
        $region67: #{tpu_custom_call.1} parent=63 // pred_region
          %s1340 = sand.u32 %s216, 1
          %s1341 = scalar_lea.sflag [#allocation4], %s1340
          %s1342 = sand.u32 %s216, 1
          %s1343 = smul.addr %s1342, 192
          %s1344 = scalar_lea.vmem [#allocation10], %s1343
          %1345 = dma.done %s1341, 3072
        $region68: #{tpu_custom_call.1} parent=63 // pred_fallthru
          _
      $region64: #{tpu_custom_call.1} parent=5 // pred_fallthru
        _
    $region6: #{tpu_custom_call.1} parent=1 // loop_footer
      %s25 = sadd.s32 1, %s21
    $region7: #{tpu_custom_call.1} parent=1 // loop_footer_branch
      %20 = sbr.rel target = $region3
    $region8: #{tpu_custom_call.1} parent=1 // loop_exit
      _
    %1346 = vsyncpa [#allocation3], 1
    %s1347 = scalar_lea.sflag [#allocation3], 1
    %1348 = vsyncpa %s1347, 1
    %1349 = vsyncpa [#allocation6], 1
    %s1350 = scalar_lea.sflag [#allocation6], 1
    %1351 = vsyncpa %s1350, 1
    %1352 = vsyncpa [#allocation9], 1
    %1353 = vsyncpa [#allocation4], 1
    %s1354 = scalar_lea.sflag [#allocation4], 1
    %1355 = vsyncpa %s1354, 1

</llo_original>
